<compile_context>
chip_gen: v6e
topology: v6e:2x2x1
jax: 0.10.0
libtpu: 0.0.40
codegen_flags: <defaults>
</compile_context>

<pallas_src>
import functools

import jax
import jax.numpy as jnp
from jax.experimental import pallas as pl
from jax.experimental.pallas import tpu as pltpu

N_HIDDEN = 30
EMBED_L = 4                                # embedding_dim in the PyTorch module
IN_FEATS = 2
PE_FEATS = IN_FEATS * (1 + 2 * EMBED_L)    # 18 = embedding_dim * 4 + 2
N_LAYERS = 6                               # 5 hidden + 1 output head
PAD = 32                                   # padded feature width (>= 30, multiple of 8)
CHUNK = 512                                # lanes per inner-loop iteration (bounds vreg pressure)
MAX_TILE = 2048                            # default per-grid-step tile (sweepable)


def pinn_mlp_kernel(x_ref, w_ref, b_ref, o_ref, *, chunk, softplus_bf16):
    """Feature-major forward; batch on lanes, strip-mined into `chunk`-lane pieces."""
    tile = x_ref.shape[1]
    n_chunks = tile // chunk

    def softplus(z):
        # Matches torch.nn.Softplus(beta=1, threshold=20): linear above threshold.
        if softplus_bf16:
            # v6e/v7x only: exp/log on the EUP at bf16 (~2x); keep select in f32.
            zb = jnp.minimum(z, 20.0).astype(jnp.bfloat16)
            soft = jnp.log(1.0 + jnp.exp(zb)).astype(jnp.float32)
        else:
            soft = jnp.log(1.0 + jnp.exp(jnp.minimum(z, 20.0)))
        return jnp.where(z > 20.0, z, soft)

    # Hoisted constant: zero padding rows 18..31 (multiply W1's zero columns).
    zpad = jnp.zeros((PAD - PE_FEATS, chunk), jnp.float32)

    def chunk_body(c, carry):
        start = pl.multiple_of(c * chunk, chunk)
        x = x_ref[:, pl.ds(start, chunk)]            # (2, chunk) f32

        # Positional encoding: only sin(x)/cos(x) hit the EUP; 2x/4x/8x come
        # from double-angle identities on the VPU.
        s1 = jnp.sin(x)
        c1 = jnp.cos(x)
        s2 = 2.0 * s1 * c1
        c2 = 1.0 - 2.0 * s1 * s1
        s4 = 2.0 * s2 * c2
        c4 = 1.0 - 2.0 * s2 * s2
        s8 = 2.0 * s4 * c4
        c8 = 1.0 - 2.0 * s4 * s4

        # Row order matches torch.cat([x, sin(2^j x), cos(2^j x), ...], dim=1)
        # after the (N,2)->(2,N) feature-major relayout.
        h = jnp.concatenate([x, s1, c1, s2, c2, s4, c4, s8, c8, zpad], axis=0)  # (32, chunk)

        # Five hidden Linear + Softplus layers: h <- softplus(W @ h + b).
        for li in range(5):
            z = jnp.dot(w_ref[li], h, preferred_element_type=jnp.float32) + b_ref[li]
            h = softplus(z)

        # Output head Linear(30, 1): only row 0 of the padded result is valid.
        z = jnp.dot(w_ref[5], h, preferred_element_type=jnp.float32) + b_ref[5]
        o_ref[:, pl.ds(start, chunk)] = z[0:1, :]    # (1, chunk) lane-dense store
        return carry

    # fori_loop (not unrolled) keeps per-chunk activations' live ranges bounded.
    jax.lax.fori_loop(0, n_chunks, chunk_body, 0)


def pack_params(params):
    """Pack 6 (W, b) pairs (PyTorch layout: W (out,in), b (out,)) into two slabs."""
    w_slab = jnp.zeros((N_LAYERS, PAD, PAD), jnp.float32)
    b_slab = jnp.zeros((N_LAYERS, PAD, 1), jnp.float32)
    for li, (w, b) in enumerate(params):
        fout, fin = w.shape
        w_slab = w_slab.at[li, :fout, :fin].set(w.astype(jnp.float32))
        b_slab = b_slab.at[li, :fout, 0].set(b.astype(jnp.float32))
    return w_slab, b_slab


def _pick_tile(n, *, max_tile=MAX_TILE, chunk=CHUNK):
    """Largest tile <= max_tile keeping >=2 grid steps (v7x megacore), >= chunk."""
    assert max_tile % chunk == 0 and chunk % 128 == 0
    tile = max_tile
    while tile > chunk and pl.cdiv(n, tile) < 2:
        tile //= 2
    return max(tile, chunk)


def make_forward_fn(params, *, max_tile=MAX_TILE, chunk=CHUNK, softplus_bf16=False):
    """Builds a jitted forward(x) with parameters packed once into resident slabs."""
    # Packed ONCE, outside the per-call path (perf feedback).
    w_slab, b_slab = pack_params(params)
    kernel = functools.partial(pinn_mlp_kernel, chunk=chunk, softplus_bf16=softplus_bf16)

    @functools.partial(jax.jit, static_argnames=("tile",))
    def _run(x, tile):
        n = x.shape[0]
        n_pad = pl.cdiv(n, tile) * tile
        # Single fused transpose+pad to the feature-major lane-dense layout
        # (replaces the old zeros + scatter pass).
        xt = jnp.pad(x.astype(jnp.float32).T, ((0, 0), (0, n_pad - n)))

        out = pl.pallas_call(
            kernel,
            out_shape=jax.ShapeDtypeStruct((1, n_pad), jnp.float32),
            grid_spec=pltpu.PrefetchScalarGridSpec(
                num_scalar_prefetch=0,
                grid=(n_pad // tile,),
                in_specs=[
                    pl.BlockSpec((IN_FEATS, tile), lambda i: (0, i)),         # x (2, TILE)
                    pl.BlockSpec((N_LAYERS, PAD, PAD), lambda i: (0, 0, 0)),  # weight slab (resident)
                    pl.BlockSpec((N_LAYERS, PAD, 1), lambda i: (0, 0, 0)),    # bias slab (resident)
                ],
                out_specs=pl.BlockSpec((1, tile), lambda i: (0, i)),
            ),
            compiler_params=pltpu.CompilerParams(
                dimension_semantics=("parallel",),   # rows split across cores (v7x: 2 TCs)
            ),
        )(xt, w_slab, b_slab)

        return out[0, :n].reshape(n, 1)

    def forward(x):
        tile = _pick_tile(x.shape[0], max_tile=max_tile, chunk=chunk)
        return _run(x, tile)

    return forward


def init_params(key):
    """PyTorch nn.Linear-style init: W (out,in), b (out,), uniform(+/-1/sqrt(fan_in))."""
    dims = [(PE_FEATS, N_HIDDEN)] + [(N_HIDDEN, N_HIDDEN)] * 4 + [(N_HIDDEN, 1)]
    params = []
    for i, (fin, fout) in enumerate(dims):
        kw, kb = jax.random.split(jax.random.fold_in(key, i))
        bound = 1.0 / (fin ** 0.5)
        w = jax.random.uniform(kw, (fout, fin), jnp.float32, -bound, bound)
        b = jax.random.uniform(kb, (fout,), jnp.float32, -bound, bound)
        params.append((w, b))
    return params


def ref_forward(x, params):
    """Pure-JAX reference mirroring the PyTorch forward (for validation)."""
    feats = [x]
    for j in range(EMBED_L):
        feats.append(jnp.sin((2.0 ** j) * x))
        feats.append(jnp.cos((2.0 ** j) * x))
    h = jnp.concatenate(feats, axis=1)
    for (w, b) in params[:-1]:
        h = jax.nn.softplus(h @ w.T + b)
    w, b = params[-1]
    return h @ w.T + b


if __name__ == "__main__":
    key = jax.random.PRNGKey(0)
    k_x1, k_x2, k_p = jax.random.split(key, 3)
    params = init_params(k_p)
    forward = make_forward_fn(params)

    # Case 1: small batch, not a tile multiple -> tile auto-drops to 512 so the
    # grid keeps 2 steps (v7x megacore); exercises batch padding.
    x1 = jax.random.uniform(k_x1, (1000, IN_FEATS), jnp.float32, 0.0, 1.0)
    out1 = jax.block_until_ready(forward(x1))
    ref1 = ref_forward(x1, params)
    assert out1.shape == (1000, 1)
    assert jnp.allclose(out1, ref1, atol=2e-4, rtol=2e-4), "mismatch (case 1)"

    # Case 2: larger batch -> tile=2048, 3 grid steps, 4-chunk inner fori_loop.
    x2 = jax.random.uniform(k_x2, (4100, IN_FEATS), jnp.float32, 0.0, 1.0)
    out2 = jax.block_until_ready(forward(x2))
    ref2 = ref_forward(x2, params)
    assert out2.shape == (4100, 1)
    assert jnp.allclose(out2, ref2, atol=2e-4, rtol=2e-4), "mismatch (case 2)"

    print("KERNEL_OK")
</pallas_src>

<mosaic_0001>
module attributes {stable_mosaic.version = 11 : i64} {
  func.func @pinn_mlp_kernel(%arg0: i32, %arg1: memref<2x512xf32, #tpu.memory_space<vmem>>, %arg2: memref<6x32x32xf32, #tpu.memory_space<vmem>>, %arg3: memref<6x32x1xf32, #tpu.memory_space<vmem>>, %arg4: memref<1x512xf32, #tpu.memory_space<vmem>>) attributes {dimension_semantics = [#tpu.dimension_semantics<parallel>], iteration_bounds = array<i64: 2>, scalar_prefetch = 0 : i64, scratch_operands = 0 : i64, tpu.core_type = #tpu.core_type<tc>, window_params = [{transform_indices = @transform_0, window_bounds = array<i64: 2, 512>}, {pipeline_mode = #tpu.pipeline_mode<synchronous>, transform_indices = @transform_1, window_bounds = array<i64: 6, 32, 32>}, {pipeline_mode = #tpu.pipeline_mode<synchronous>, transform_indices = @transform_2, window_bounds = array<i64: 6, 32, 1>}, {transform_indices = @transform_3, window_bounds = array<i64: 1, 512>}]} {
    %cst = arith.constant 0.000000e+00 : f32
    %0 = vector.broadcast %cst : f32 to vector<14x512xf32>
    %c0_i32 = arith.constant 0 : i32
    %c512_i32 = arith.constant 512 : i32
    %1 = arith.muli %c0_i32, %c512_i32 : i32
    %2 = tpu.assume_multiple %1, 512 : i32
    %c0 = arith.constant 0 : index
    %3 = arith.index_cast %2 : i32 to index
    %4 = vector.load %arg1[%c0, %3] : memref<2x512xf32, #tpu.memory_space<vmem>>, vector<2x512xf32>
    %5 = math.sin %4 : vector<2x512xf32>
    %6 = math.cos %4 : vector<2x512xf32>
    %cst_0 = arith.constant 2.000000e+00 : f32
    %7 = vector.broadcast %cst_0 : f32 to vector<2x512xf32>
    %8 = arith.mulf %7, %5 : vector<2x512xf32>
    %9 = arith.mulf %8, %6 : vector<2x512xf32>
    %cst_1 = arith.constant 2.000000e+00 : f32
    %10 = vector.broadcast %cst_1 : f32 to vector<2x512xf32>
    %11 = arith.mulf %10, %5 : vector<2x512xf32>
    %12 = arith.mulf %11, %5 : vector<2x512xf32>
    %cst_2 = arith.constant 1.000000e+00 : f32
    %13 = vector.broadcast %cst_2 : f32 to vector<2x512xf32>
    %14 = arith.subf %13, %12 : vector<2x512xf32>
    %cst_3 = arith.constant 2.000000e+00 : f32
    %15 = vector.broadcast %cst_3 : f32 to vector<2x512xf32>
    %16 = arith.mulf %15, %9 : vector<2x512xf32>
    %17 = arith.mulf %16, %14 : vector<2x512xf32>
    %cst_4 = arith.constant 2.000000e+00 : f32
    %18 = vector.broadcast %cst_4 : f32 to vector<2x512xf32>
    %19 = arith.mulf %18, %9 : vector<2x512xf32>
    %20 = arith.mulf %19, %9 : vector<2x512xf32>
    %cst_5 = arith.constant 1.000000e+00 : f32
    %21 = vector.broadcast %cst_5 : f32 to vector<2x512xf32>
    %22 = arith.subf %21, %20 : vector<2x512xf32>
    %cst_6 = arith.constant 2.000000e+00 : f32
    %23 = vector.broadcast %cst_6 : f32 to vector<2x512xf32>
    %24 = arith.mulf %23, %17 : vector<2x512xf32>
    %25 = arith.mulf %24, %22 : vector<2x512xf32>
    %cst_7 = arith.constant 2.000000e+00 : f32
    %26 = vector.broadcast %cst_7 : f32 to vector<2x512xf32>
    %27 = arith.mulf %26, %17 : vector<2x512xf32>
    %28 = arith.mulf %27, %17 : vector<2x512xf32>
    %cst_8 = arith.constant 1.000000e+00 : f32
    %29 = vector.broadcast %cst_8 : f32 to vector<2x512xf32>
    %30 = arith.subf %29, %28 : vector<2x512xf32>
    %31 = tpu.concatenate %4, %5, %6, %9, %14, %17, %22, %25, %30, %0 in 0 : vector<2x512xf32>, vector<2x512xf32>, vector<2x512xf32>, vector<2x512xf32>, vector<2x512xf32>, vector<2x512xf32>, vector<2x512xf32>, vector<2x512xf32>, vector<2x512xf32>, vector<14x512xf32> -> vector<32x512xf32>
    %c0_9 = arith.constant 0 : index
    %c0_10 = arith.constant 0 : index
    %c0_11 = arith.constant 0 : index
    %32 = vector.load %arg2[%c0_9, %c0_10, %c0_11] : memref<6x32x32xf32, #tpu.memory_space<vmem>>, vector<1x32x32xf32>
    %33 = vector.shape_cast %32 : vector<1x32x32xf32> to vector<32x32xf32>
    %cst_12 = arith.constant dense<0.000000e+00> : vector<32x512xf32>
    %34 = tpu.matmul %33, %31, %cst_12 {dimension_numbers = #tpu.dot_dimension_numbers<[1], [0], [0], [1], [0, 0, 1, 1], [], []>} : vector<32x32xf32>, vector<32x512xf32>, vector<32x512xf32> -> vector<32x512xf32>
    %c0_13 = arith.constant 0 : index
    %c0_14 = arith.constant 0 : index
    %c0_15 = arith.constant 0 : index
    %35 = vector.load %arg3[%c0_13, %c0_14, %c0_15] : memref<6x32x1xf32, #tpu.memory_space<vmem>>, vector<1x32x1xf32>
    %36 = vector.shape_cast %35 : vector<1x32x1xf32> to vector<32x1xf32>
    %37 = vector.broadcast %36 : vector<32x1xf32> to vector<32x512xf32>
    %38 = arith.addf %34, %37 : vector<32x512xf32>
    %cst_16 = arith.constant 2.000000e+01 : f32
    %39 = vector.broadcast %cst_16 : f32 to vector<32x512xf32>
    %40 = arith.minimumf %38, %39 : vector<32x512xf32>
    %41 = math.exp %40 : vector<32x512xf32>
    %cst_17 = arith.constant 1.000000e+00 : f32
    %42 = vector.broadcast %cst_17 : f32 to vector<32x512xf32>
    %43 = arith.addf %42, %41 : vector<32x512xf32>
    %44 = math.log %43 : vector<32x512xf32>
    %cst_18 = arith.constant 2.000000e+01 : f32
    %45 = vector.broadcast %cst_18 : f32 to vector<32x512xf32>
    %46 = arith.cmpf ogt, %38, %45 : vector<32x512xf32>
    %47 = arith.select %46, %38, %44 : vector<32x512xi1>, vector<32x512xf32>
    %c1 = arith.constant 1 : index
    %c0_19 = arith.constant 0 : index
    %c0_20 = arith.constant 0 : index
    %48 = vector.load %arg2[%c1, %c0_19, %c0_20] : memref<6x32x32xf32, #tpu.memory_space<vmem>>, vector<1x32x32xf32>
    %49 = vector.shape_cast %48 : vector<1x32x32xf32> to vector<32x32xf32>
    %cst_21 = arith.constant dense<0.000000e+00> : vector<32x512xf32>
    %50 = tpu.matmul %49, %47, %cst_21 {dimension_numbers = #tpu.dot_dimension_numbers<[1], [0], [0], [1], [0, 0, 1, 1], [], []>} : vector<32x32xf32>, vector<32x512xf32>, vector<32x512xf32> -> vector<32x512xf32>
    %c1_22 = arith.constant 1 : index
    %c0_23 = arith.constant 0 : index
    %c0_24 = arith.constant 0 : index
    %51 = vector.load %arg3[%c1_22, %c0_23, %c0_24] : memref<6x32x1xf32, #tpu.memory_space<vmem>>, vector<1x32x1xf32>
    %52 = vector.shape_cast %51 : vector<1x32x1xf32> to vector<32x1xf32>
    %53 = vector.broadcast %52 : vector<32x1xf32> to vector<32x512xf32>
    %54 = arith.addf %50, %53 : vector<32x512xf32>
    %cst_25 = arith.constant 2.000000e+01 : f32
    %55 = vector.broadcast %cst_25 : f32 to vector<32x512xf32>
    %56 = arith.minimumf %54, %55 : vector<32x512xf32>
    %57 = math.exp %56 : vector<32x512xf32>
    %cst_26 = arith.constant 1.000000e+00 : f32
    %58 = vector.broadcast %cst_26 : f32 to vector<32x512xf32>
    %59 = arith.addf %58, %57 : vector<32x512xf32>
    %60 = math.log %59 : vector<32x512xf32>
    %cst_27 = arith.constant 2.000000e+01 : f32
    %61 = vector.broadcast %cst_27 : f32 to vector<32x512xf32>
    %62 = arith.cmpf ogt, %54, %61 : vector<32x512xf32>
    %63 = arith.select %62, %54, %60 : vector<32x512xi1>, vector<32x512xf32>
    %c2 = arith.constant 2 : index
    %c0_28 = arith.constant 0 : index
    %c0_29 = arith.constant 0 : index
    %64 = vector.load %arg2[%c2, %c0_28, %c0_29] : memref<6x32x32xf32, #tpu.memory_space<vmem>>, vector<1x32x32xf32>
    %65 = vector.shape_cast %64 : vector<1x32x32xf32> to vector<32x32xf32>
    %cst_30 = arith.constant dense<0.000000e+00> : vector<32x512xf32>
    %66 = tpu.matmul %65, %63, %cst_30 {dimension_numbers = #tpu.dot_dimension_numbers<[1], [0], [0], [1], [0, 0, 1, 1], [], []>} : vector<32x32xf32>, vector<32x512xf32>, vector<32x512xf32> -> vector<32x512xf32>
    %c2_31 = arith.constant 2 : index
    %c0_32 = arith.constant 0 : index
    %c0_33 = arith.constant 0 : index
    %67 = vector.load %arg3[%c2_31, %c0_32, %c0_33] : memref<6x32x1xf32, #tpu.memory_space<vmem>>, vector<1x32x1xf32>
    %68 = vector.shape_cast %67 : vector<1x32x1xf32> to vector<32x1xf32>
    %69 = vector.broadcast %68 : vector<32x1xf32> to vector<32x512xf32>
    %70 = arith.addf %66, %69 : vector<32x512xf32>
    %cst_34 = arith.constant 2.000000e+01 : f32
    %71 = vector.broadcast %cst_34 : f32 to vector<32x512xf32>
    %72 = arith.minimumf %70, %71 : vector<32x512xf32>
    %73 = math.exp %72 : vector<32x512xf32>
    %cst_35 = arith.constant 1.000000e+00 : f32
    %74 = vector.broadcast %cst_35 : f32 to vector<32x512xf32>
    %75 = arith.addf %74, %73 : vector<32x512xf32>
    %76 = math.log %75 : vector<32x512xf32>
    %cst_36 = arith.constant 2.000000e+01 : f32
    %77 = vector.broadcast %cst_36 : f32 to vector<32x512xf32>
    %78 = arith.cmpf ogt, %70, %77 : vector<32x512xf32>
    %79 = arith.select %78, %70, %76 : vector<32x512xi1>, vector<32x512xf32>
    %c3 = arith.constant 3 : index
    %c0_37 = arith.constant 0 : index
    %c0_38 = arith.constant 0 : index
    %80 = vector.load %arg2[%c3, %c0_37, %c0_38] : memref<6x32x32xf32, #tpu.memory_space<vmem>>, vector<1x32x32xf32>
    %81 = vector.shape_cast %80 : vector<1x32x32xf32> to vector<32x32xf32>
    %cst_39 = arith.constant dense<0.000000e+00> : vector<32x512xf32>
    %82 = tpu.matmul %81, %79, %cst_39 {dimension_numbers = #tpu.dot_dimension_numbers<[1], [0], [0], [1], [0, 0, 1, 1], [], []>} : vector<32x32xf32>, vector<32x512xf32>, vector<32x512xf32> -> vector<32x512xf32>
    %c3_40 = arith.constant 3 : index
    %c0_41 = arith.constant 0 : index
    %c0_42 = arith.constant 0 : index
    %83 = vector.load %arg3[%c3_40, %c0_41, %c0_42] : memref<6x32x1xf32, #tpu.memory_space<vmem>>, vector<1x32x1xf32>
    %84 = vector.shape_cast %83 : vector<1x32x1xf32> to vector<32x1xf32>
    %85 = vector.broadcast %84 : vector<32x1xf32> to vector<32x512xf32>
    %86 = arith.addf %82, %85 : vector<32x512xf32>
    %cst_43 = arith.constant 2.000000e+01 : f32
    %87 = vector.broadcast %cst_43 : f32 to vector<32x512xf32>
    %88 = arith.minimumf %86, %87 : vector<32x512xf32>
    %89 = math.exp %88 : vector<32x512xf32>
    %cst_44 = arith.constant 1.000000e+00 : f32
    %90 = vector.broadcast %cst_44 : f32 to vector<32x512xf32>
    %91 = arith.addf %90, %89 : vector<32x512xf32>
    %92 = math.log %91 : vector<32x512xf32>
    %cst_45 = arith.constant 2.000000e+01 : f32
    %93 = vector.broadcast %cst_45 : f32 to vector<32x512xf32>
    %94 = arith.cmpf ogt, %86, %93 : vector<32x512xf32>
    %95 = arith.select %94, %86, %92 : vector<32x512xi1>, vector<32x512xf32>
    %c4 = arith.constant 4 : index
    %c0_46 = arith.constant 0 : index
    %c0_47 = arith.constant 0 : index
    %96 = vector.load %arg2[%c4, %c0_46, %c0_47] : memref<6x32x32xf32, #tpu.memory_space<vmem>>, vector<1x32x32xf32>
    %97 = vector.shape_cast %96 : vector<1x32x32xf32> to vector<32x32xf32>
    %cst_48 = arith.constant dense<0.000000e+00> : vector<32x512xf32>
    %98 = tpu.matmul %97, %95, %cst_48 {dimension_numbers = #tpu.dot_dimension_numbers<[1], [0], [0], [1], [0, 0, 1, 1], [], []>} : vector<32x32xf32>, vector<32x512xf32>, vector<32x512xf32> -> vector<32x512xf32>
    %c4_49 = arith.constant 4 : index
    %c0_50 = arith.constant 0 : index
    %c0_51 = arith.constant 0 : index
    %99 = vector.load %arg3[%c4_49, %c0_50, %c0_51] : memref<6x32x1xf32, #tpu.memory_space<vmem>>, vector<1x32x1xf32>
    %100 = vector.shape_cast %99 : vector<1x32x1xf32> to vector<32x1xf32>
    %101 = vector.broadcast %100 : vector<32x1xf32> to vector<32x512xf32>
    %102 = arith.addf %98, %101 : vector<32x512xf32>
    %cst_52 = arith.constant 2.000000e+01 : f32
    %103 = vector.broadcast %cst_52 : f32 to vector<32x512xf32>
    %104 = arith.minimumf %102, %103 : vector<32x512xf32>
    %105 = math.exp %104 : vector<32x512xf32>
    %cst_53 = arith.constant 1.000000e+00 : f32
    %106 = vector.broadcast %cst_53 : f32 to vector<32x512xf32>
    %107 = arith.addf %106, %105 : vector<32x512xf32>
    %108 = math.log %107 : vector<32x512xf32>
    %cst_54 = arith.constant 2.000000e+01 : f32
    %109 = vector.broadcast %cst_54 : f32 to vector<32x512xf32>
    %110 = arith.cmpf ogt, %102, %109 : vector<32x512xf32>
    %111 = arith.select %110, %102, %108 : vector<32x512xi1>, vector<32x512xf32>
    %c5 = arith.constant 5 : index
    %c0_55 = arith.constant 0 : index
    %c0_56 = arith.constant 0 : index
    %112 = vector.load %arg2[%c5, %c0_55, %c0_56] : memref<6x32x32xf32, #tpu.memory_space<vmem>>, vector<1x32x32xf32>
    %113 = vector.shape_cast %112 : vector<1x32x32xf32> to vector<32x32xf32>
    %cst_57 = arith.constant dense<0.000000e+00> : vector<32x512xf32>
    %114 = tpu.matmul %113, %111, %cst_57 {dimension_numbers = #tpu.dot_dimension_numbers<[1], [0], [0], [1], [0, 0, 1, 1], [], []>} : vector<32x32xf32>, vector<32x512xf32>, vector<32x512xf32> -> vector<32x512xf32>
    %c5_58 = arith.constant 5 : index
    %c0_59 = arith.constant 0 : index
    %c0_60 = arith.constant 0 : index
    %115 = vector.load %arg3[%c5_58, %c0_59, %c0_60] : memref<6x32x1xf32, #tpu.memory_space<vmem>>, vector<1x32x1xf32>
    %116 = vector.shape_cast %115 : vector<1x32x1xf32> to vector<32x1xf32>
    %117 = vector.broadcast %116 : vector<32x1xf32> to vector<32x512xf32>
    %118 = arith.addf %114, %117 : vector<32x512xf32>
    %119 = vector.extract_strided_slice %118 {offsets = [0, 0], sizes = [1, 512], strides = [1, 1]} : vector<32x512xf32> to vector<1x512xf32>
    %c0_61 = arith.constant 0 : index
    %120 = arith.index_cast %2 : i32 to index
    %121 = vector.load %arg4[%c0_61, %120] : memref<1x512xf32, #tpu.memory_space<vmem>>, vector<1x512xf32>
    tpu.vector_store %arg4[%c0_61, %120], %119 {strides = array<i32>} : memref<1x512xf32, #tpu.memory_space<vmem>>, vector<1x512xf32>,
    %c1_i32 = arith.constant 1 : i32
    return
  }
  func.func @transform_0(%arg0: i32) -> (i32, i32) {
    %c0_i32 = arith.constant 0 : i32
    %c0_i32_0 = arith.constant 0 : i32
    return %c0_i32, %arg0 : i32, i32
  }
  func.func @transform_1(%arg0: i32) -> (i32, i32, i32) {
    %c0_i32 = arith.constant 0 : i32
    %c0_i32_0 = arith.constant 0 : i32
    %c0_i32_1 = arith.constant 0 : i32
    %c0_i32_2 = arith.constant 0 : i32
    return %c0_i32, %c0_i32_0, %c0_i32_1 : i32, i32, i32
  }
  func.func @transform_2(%arg0: i32) -> (i32, i32, i32) {
    %c0_i32 = arith.constant 0 : i32
    %c0_i32_0 = arith.constant 0 : i32
    %c0_i32_1 = arith.constant 0 : i32
    %c0_i32_2 = arith.constant 0 : i32
    return %c0_i32, %c0_i32_0, %c0_i32_1 : i32, i32, i32
  }
  func.func @transform_3(%arg0: i32) -> (i32, i32) {
    %c0_i32 = arith.constant 0 : i32
    %c0_i32_0 = arith.constant 0 : i32
    return %c0_i32, %arg0 : i32, i32
  }
}

</mosaic_0001>

<llo_original>
// kernel: _run.1
$region0: #{_run.1}
  #allocation0 [shape = 'u32[]', space=smem, size = 0x4, offset = 0x4, fixed_abs, tag = 'smem constant byte address 0x4 - core index']
  #allocation1 [shape = 'u32[144,128]{1,0:T(1,128)}', space=vmem, size = 0x12000, scoped, tag = 'internal scratch']
  %s0 = inlined_call_operand.vmem [shape: f32[2,1024], index: 0, kind: input, shape index: {}]
  %s1 = inlined_call_operand.hbm [shape: f32[6,32,32], index: 1, kind: input, shape index: {}]
  %s2 = inlined_call_operand.hbm [shape: f32[6,32,1], index: 2, kind: input, shape index: {}]
  %s3 = inlined_call_operand.vmem [shape: f32[1,1024], index: 3, kind: output, shape index: {}]
  %s4 = sld [smem:[#allocation0]]
  $region53: #{_run.1} parent=0
    _
  %s6 = ssub.s32 1, %s4
  %s7 = scalar_select 0, %s6, %s4
  $region1: #{_run.1} parent=0
    #allocation2 [shape = 'u8[98304]{0}', space=vmem, size = 0x18000, scoped, tag = 'input window, operand 1, single buffered']
    #allocation3 [shape = 's32[2]{0}', space=sflag, size = 0x8, scoped, tag = 'scoped memory for _run.1']
    #allocation4 [shape = 'u8[98304]{0}', space=vmem, size = 0x18000, scoped, tag = 'input window, operand 2, single buffered']
    #allocation5 [shape = 's32[1]{0}', space=sflag, size = 0x4, scoped, tag = 'scoped memory for _run.1']
    %8 = vsyncpa [#allocation3], 0
    %9 = vsyncpa [#allocation5], 0
    loop: start=0, step=1, limit=4
    $region2: #{_run.1} parent=1 // loop_pre_header
      _
    $region3: #{_run.1} parent=1 // loop_header
      %s11 = sphi 0, %s15
      %p12 = scmp.ge.s32.totalorder %s11, 4
      %s21 = sphi 0, %s23
      %s24 = sphi 0, %s21
      %s25 = sphi 0, %s24
      %s41 = sphi 0, %s25
      %s45 = sphi 0, %s45
      %s47 = sphi 0, %s45
      %s48 = sphi 0, %s47
      %s62 = sphi 0, %s48
      %s66 = sphi 0, %s66
      %s68 = sphi 0, %s66
      %s69 = sphi 0, %s68
      %s83 = sphi 0, %s69
      %s89 = sphi 0, %s91
      %s92 = sphi 0, %s89
      %s93 = sphi 0, %s92
      %s109 = sphi 0, %s93
    $region4: #{_run.1} parent=1 // loop_header_branch
      %14 = sbr.rel (%p12) target = $region8
    $region5: #{_run.1} parent=1 // loop_body
      %s16 = ssub.s32 %s11, 1
      %s17 = ssub.s32 %s11, 2
      %s18 = sadd.s32 %s11, 1
      %s19 = ssub.s32 %s11, %s18
      %p20 = scmp.eq.s32.totalorder %s19, 0
      %s22 = sadd.s32 %s21, 1
      %s23 = scalar_select %p20, %s21, %s22
      %p26 = pneg %p20
      %p27 = scmp.eq.s32.totalorder %s11, 1
      %p28 = por %p26, %p27
      %p29 = scmp.ne.s32.totalorder %s21, %s24
      %p30 = scmp.eq.s32.totalorder %s11, 0
      %p31 = por %p29, %p30
      %p32 = scmp.ne.s32.totalorder %s21, %s24
      %p33 = scmp.eq.s32.totalorder %s16, 1
      %p34 = por %p32, %p33
      %p35 = scmp.ne.s32.totalorder %s24, %s25
      %p36 = scmp.eq.s32.totalorder %s16, 0
      %p37 = por %p35, %p36
      %p38 = scmp.ne.s32.totalorder %s24, %s25
      %p39 = scmp.eq.s32.totalorder %s17, 1
      %p40 = por %p38, %p39
      %p42 = scmp.ne.s32.totalorder %s25, %s41
      %p43 = scmp.eq.s32.totalorder %s17, 0
      %p44 = por %p42, %p43
      %s46 = sadd.s32 %s45, 1
      %p49 = scmp.eq.s32.totalorder %s11, 1
      %p50 = scmp.ne.s32.totalorder %s45, %s47
      %p51 = scmp.eq.s32.totalorder %s11, 0
      %p52 = por %p50, %p51
      %p53 = scmp.ne.s32.totalorder %s45, %s47
      %p54 = scmp.eq.s32.totalorder %s16, 1
      %p55 = por %p53, %p54
      %p56 = scmp.ne.s32.totalorder %s47, %s48
      %p57 = scmp.eq.s32.totalorder %s16, 0
      %p58 = por %p56, %p57
      %p59 = scmp.ne.s32.totalorder %s47, %s48
      %p60 = scmp.eq.s32.totalorder %s17, 1
      %p61 = por %p59, %p60
      %p63 = scmp.ne.s32.totalorder %s48, %s62
      %p64 = scmp.eq.s32.totalorder %s17, 0
      %p65 = por %p63, %p64
      %s67 = sadd.s32 %s66, 1
      %p70 = scmp.eq.s32.totalorder %s11, 1
      %p71 = scmp.ne.s32.totalorder %s66, %s68
      %p72 = scmp.eq.s32.totalorder %s11, 0
      %p73 = por %p71, %p72
      %p74 = scmp.ne.s32.totalorder %s66, %s68
      %p75 = scmp.eq.s32.totalorder %s16, 1
      %p76 = por %p74, %p75
      %p77 = scmp.ne.s32.totalorder %s68, %s69
      %p78 = scmp.eq.s32.totalorder %s16, 0
      %p79 = por %p77, %p78
      %p80 = scmp.ne.s32.totalorder %s68, %s69
      %p81 = scmp.eq.s32.totalorder %s17, 1
      %p82 = por %p80, %p81
      %p84 = scmp.ne.s32.totalorder %s69, %s83
      %p85 = scmp.eq.s32.totalorder %s17, 0
      %p86 = por %p84, %p85
      %s87 = ssub.s32 %s11, %s18
      %p88 = scmp.eq.s32.totalorder %s87, 0
      %s90 = sadd.s32 %s89, 1
      %s91 = scalar_select %p88, %s89, %s90
      %p94 = pneg %p88
      %p95 = scmp.eq.s32.totalorder %s11, 1
      %p96 = por %p94, %p95
      %p97 = scmp.ne.s32.totalorder %s89, %s92
      %p98 = scmp.eq.s32.totalorder %s11, 0
      %p99 = por %p97, %p98
      %p100 = scmp.ne.s32.totalorder %s89, %s92
      %p101 = scmp.eq.s32.totalorder %s16, 1
      %p102 = por %p100, %p101
      %p103 = scmp.ne.s32.totalorder %s92, %s93
      %p104 = scmp.eq.s32.totalorder %s16, 0
      %p105 = por %p103, %p104
      %p106 = scmp.ne.s32.totalorder %s92, %s93
      %p107 = scmp.eq.s32.totalorder %s17, 1
      %p108 = por %p106, %p107
      %p110 = scmp.ne.s32.totalorder %s93, %s109
      %p111 = scmp.eq.s32.totalorder %s17, 0
      %p112 = por %p110, %p111
      %p113 = scmp.le.s32.totalorder 1, %s11
      %p114 = scmp.lt.s32.totalorder %s11, 3
      %p115 = pnand %p113, %p114
      %p116 = pneg %p115
      // Predicated region
      $region9: #{_run.1} parent=5 // pred_check
        _
      $region10: #{_run.1} parent=5 // pred_check_branch
        %118 = sbr.rel (%p115) target = $region12
      $region11: #{_run.1} parent=5 // pred_region
        %s119 = ssub.s32 %s11, 1
        // Predicated region
        $region13: #{_run.1} parent=11 // pred_check
          %p120 = pneg %p58
        $region14: #{_run.1} parent=11 // pred_check_branch
          %122 = sbr.rel (%p120) target = $region16
        $region15: #{_run.1} parent=11 // pred_region
          %s124 = ssub.s32 3072, 3072
          %125 = vsyncadd [#allocation3], %s124
          %s126 = sshll.u32 [#allocation2], 4
          %s127 = int_to_ptr.vmem [resolvable:$true] %s126
          %132 = dma.hbm_to_vmem [thread:$0]  %s1, 3072, %s127, [#allocation3], 128, 128, 8
        $region16: #{_run.1} parent=11 // pred_fallthru
          _
        // Predicated region
        $region17: #{_run.1} parent=11 // pred_check
          %p133 = pneg %p79
        $region18: #{_run.1} parent=11 // pred_check_branch
          %135 = sbr.rel (%p133) target = $region20
        $region19: #{_run.1} parent=11 // pred_region
          %s137 = ssub.s32 3072, 3072
          %138 = vsyncadd [#allocation5], %s137
          %s139 = sshll.u32 [#allocation4], 4
          %s140 = int_to_ptr.vmem [resolvable:$true] %s139
          %145 = dma.hbm_to_vmem [thread:$0]  %s2, 3072, %s140, [#allocation5], 128, 128, 8
        $region20: #{_run.1} parent=11 // pred_fallthru
          _
      $region12: #{_run.1} parent=5 // pred_fallthru
        _
      %p146 = scmp.lt.s32.totalorder %s11, 2
      // Predicated region
      $region21: #{_run.1} parent=5 // pred_check
        %p147 = pneg %p146
      $region22: #{_run.1} parent=5 // pred_check_branch
        %149 = sbr.rel (%p147) target = $region24
      $region23: #{_run.1} parent=5 // pred_region
        // Predicated region
        $region25: #{_run.1} parent=23 // pred_check
          %p150 = pneg %p31
        $region26: #{_run.1} parent=23 // pred_check_branch
          %152 = sbr.rel (%p150) target = $region28
        $region27: #{_run.1} parent=23 // pred_region
          %s153 = smul.u32 4, %s11
          %p154 = scmp.lt.s32.totalorder %s153, 7
          %s155 = scalar_select %p154, %s153, 7
          %s156 = smul.addr %s155, 2
          %s157 = scalar_lea.vmem %s0, %s156
          %s158 = smul.u32 4, %s11
        $region28: #{_run.1} parent=23 // pred_fallthru
          _
      $region24: #{_run.1} parent=5 // pred_fallthru
        _
      %p159 = scmp.le.s32.totalorder 1, %s11
      %p160 = scmp.lt.s32.totalorder %s11, 3
      %p161 = pnand %p159, %p160
      %p162 = pneg %p161
      // Predicated region
      $region29: #{_run.1} parent=5 // pred_check
        _
      $region30: #{_run.1} parent=5 // pred_check_branch
        %164 = sbr.rel (%p161) target = $region32
      $region31: #{_run.1} parent=5 // pred_region
        %s165 = ssub.s32 %s11, 1
        // Predicated region
        $region33: #{_run.1} parent=31 // pred_check
          %p166 = pneg %p58
        $region34: #{_run.1} parent=31 // pred_check_branch
          %168 = sbr.rel (%p166) target = $region36
        $region35: #{_run.1} parent=31 // pred_region
          %169 = dma.done [#allocation3], 3072
        $region36: #{_run.1} parent=31 // pred_fallthru
          _
        // Predicated region
        $region37: #{_run.1} parent=31 // pred_check
          %p170 = pneg %p79
        $region38: #{_run.1} parent=31 // pred_check_branch
          %172 = sbr.rel (%p170) target = $region40
        $region39: #{_run.1} parent=31 // pred_region
          %173 = dma.done [#allocation5], 3072
        $region40: #{_run.1} parent=31 // pred_fallthru
          _
        %s174 = smul.u32 4, %s16
        %p175 = scmp.lt.s32.totalorder %s174, 7
        %s176 = scalar_select %p175, %s174, 7
        %s177 = smul.addr %s176, 2
        %s178 = scalar_lea.vmem %s0, %s177
        %p179 = pneg %p37
        %p180 = pneg %p34
        %p181 = pneg %p58
        %p182 = pneg %p55
        %p183 = pneg %p79
        %p184 = pneg %p76
        %p185 = pneg %p105
        %p186 = pneg %p102
        %s187 = smul.u32 4, %s16
        %p188 = scmp.lt.s32.totalorder %s187, 7
        %s189 = scalar_select %p188, %s187, 7
        %s190 = scalar_lea.vmem %s3, %s189
        %s191 = smul.u32 4, %s16
        %p192 = scmp.lt.s32.totalorder %s191, 7
        %s193 = scalar_select %p192, %s191, 7
        %s194 = smul.addr %s193, 2
        %s195 = scalar_lea.vmem %s0, %s194
        %s196 = smul.u32 4, %s16
        %s197 = smul.u32 4, %s16
        %p198 = scmp.lt.s32.totalorder %s197, 7
        %s199 = scalar_select %p198, %s197, 7
        %s200 = scalar_lea.vmem %s3, %s199
        %s201 = smul.u32 4, %s16
        %v202 = vld [vmem:[%s195] sm:$0xff]
        %v203 = vand.u32 2147483647, %v202
        %vm204 = vcmp.le.f32.partialorder %v203, 0.7853982
        %vm205 = vcmp.lt.s32.totalorder %v202, 0
        %v206 = vand.u32 %v202, 2139095040
        %v207 = vshrl.u32 %v206, 23
        %v208 = vsub.s32 %v207, 127
        %v209 = vand.u32 2147483647, %v202
        %v210 = vand.u32 %v209, 8388607
        %v211 = vor.u32 %v210, 8388608
        %v212 = vsub.s32 0, %v211
        %v213 = vadd.s32 %v208, 1
        %vm214 = vcmp.gt.s32.totalorder %v213, 0
        %v215 = vsel %vm214, %v213, 0
        %v216 = vshrl.u32 %v215, 5
        %v217 = vand.u32 %v215, 31
        %v218 = vsub.s32 32, %v217
        %v219 = vshrl.u32 683565275, %v218
        %v220 = vshll.u32 683565275, %v217
        %v221 = vshrl.u32 2475754826, %v218
        %v222 = vor.u32 %v220, %v221
        %v223 = vshll.u32 2475754826, %v217
        %v224 = vshrl.u32 2131351028, %v218
        %v225 = vor.u32 %v223, %v224
        %v226 = vshll.u32 2131351028, %v217
        %v227 = vshrl.u32 2102212464, %v218
        %v228 = vor.u32 %v226, %v227
        %v229 = vshll.u32 2102212464, %v217
        %v230 = vshrl.u32 920167782, %v218
        %v231 = vor.u32 %v229, %v230
        %v232 = vshll.u32 920167782, %v217
        %v233 = vshrl.u32 1326507024, %v218
        %v234 = vor.u32 %v232, %v233
        %vm235 = vcmp.lt.s32.totalorder %v216, 1
        %vm236 = vcmp.lt.s32.totalorder %v216, 2
        %vm237 = vcmp.lt.s32.totalorder %v216, 3
        %vm238 = vcmp.lt.s32.totalorder %v216, 4
        %v239 = vsel %vm235, %v219, %v222
        %v240 = vsel %vm238, %v228, 2102212464
        %v241 = vsel %vm237, %v225, %v240
        %v242 = vsel %vm236, %v239, %v241
        %v243 = vsel %vm235, %v222, %v225
        %v244 = vsel %vm238, %v231, 920167782
        %v245 = vsel %vm237, %v228, %v244
        %v246 = vsel %vm236, %v243, %v245
        %v247 = vsel %vm235, %v225, %v228
        %v248 = vsel %vm238, %v234, 1326507024
        %v249 = vsel %vm237, %v231, %v248
        %v250 = vsel %vm236, %v247, %v249
        %v251 = vshll.u32 %v211, 8
        %v252 = vmul.u32.u64.compose %v251, %v250
        %v253 = vextract.low.u32 %v252
        %v254 = vextract.high.u32 %v252
        %v255 = vmul.u32.u64.compose %v251, %v246
        %v256 = vextract.low.u32 %v255
        %v257 = vextract.high.u32 %v255
        %v258 = vmul.u32 %v251, %v242
        %v259 = vadd.s32 %v254, %v256
        %vm260 = vc.u32 %v254, %v256
        %v261 = vadd.s32 %v257, 1
        %v262 = vsel %vm260, %v261, %v257
        %v263 = vadd.s32 %v258, %v262
        %v264 = vadd.s32 %v263, 536870912
        %v265 = vshrl.u32 %v264, 30
        %v266 = vshll.u32 %v265, 30
        %v267 = vsub.s32 %v263, %v266
        %vm268 = vcmp.lt.s32.totalorder %v267, 0
        %v269 = vsub.s32 0, %v267
        %v270 = vsel %vm268, %v269, %v267
        %v271 = vclz %v270
        %v272 = vsub.s32 %v271, 2
        %vm273 = vcmp.gt.s32.totalorder 0, %v272
        %v274 = vsel %vm273, 0, %v272
        %v275 = vsub.s32 32, %v274
        %v276 = vshll.u32 %v267, %v274
        %v277 = vshrl.u32 %v259, %v275
        %v278 = vor.u32 %v276, %v277
        %v279 = vsub.s32 4294967266, %v274
        %v280 = vadd.s32 %v279, 127
        %v281 = vshll.u32 %v280, 23
        %v282 = vor.u32 4788187, %v281
        %v283 = vand.u32 2147483647, %v282
        %v285 = vcvt.s32.f32 %v278
        %v286 = vmul.f32 %v285, %v283
        %v287 = vxor.u32 %v286, 2147483648
        %v288 = vsel %vm205, %v287, %v286
        %v289 = vsub.s32 4, %v265
        %v290 = vsel %vm205, %v289, %v265
        %v291 = vsel %vm204, %v202, %v288
        %v292 = vsel %vm204, 0, %v290
        %v293 = vcosq.f32.pop %v291
        %v294 = vsinq.f32.pop %v291
        %vm295 = vweird.f32 %v202
        %v296 = vadd.s32 %v292, 3
        %v297 = vand.u32 %v296, 3
        %vm298 = vcmp.lt.s32.totalorder %v297, 2
        %vm299 = vcmp.eq.s32.totalorder %v297, 0
        %v300 = vxor.u32 %v294, 2147483648
        %v301 = vsel %vm299, %v293, %v300
        %vm302 = vcmp.eq.s32.totalorder %v297, 2
        %v303 = vxor.u32 %v293, 2147483648
        %v304 = vsel %vm302, %v303, %v294
        %v305 = vsel %vm298, %v301, %v304
        %v306 = vsel %vm295, nan, %v305
        %v307 = vand.u32 2147483647, %v202
        %vm308 = vcmp.le.f32.partialorder %v307, 0.7853982
        %vm309 = vcmp.lt.s32.totalorder %v202, 0
        %v310 = vand.u32 %v202, 2139095040
        %v311 = vshrl.u32 %v310, 23
        %v312 = vsub.s32 %v311, 127
        %v313 = vand.u32 2147483647, %v202
        %v314 = vand.u32 %v313, 8388607
        %v315 = vor.u32 %v314, 8388608
        %v316 = vsub.s32 0, %v315
        %v317 = vadd.s32 %v312, 1
        %vm318 = vcmp.gt.s32.totalorder %v317, 0
        %v319 = vsel %vm318, %v317, 0
        %v320 = vshrl.u32 %v319, 5
        %v321 = vand.u32 %v319, 31
        %v322 = vsub.s32 32, %v321
        %v323 = vshrl.u32 683565275, %v322
        %v324 = vshll.u32 683565275, %v321
        %v325 = vshrl.u32 2475754826, %v322
        %v326 = vor.u32 %v324, %v325
        %v327 = vshll.u32 2475754826, %v321
        %v328 = vshrl.u32 2131351028, %v322
        %v329 = vor.u32 %v327, %v328
        %v330 = vshll.u32 2131351028, %v321
        %v331 = vshrl.u32 2102212464, %v322
        %v332 = vor.u32 %v330, %v331
        %v333 = vshll.u32 2102212464, %v321
        %v334 = vshrl.u32 920167782, %v322
        %v335 = vor.u32 %v333, %v334
        %v336 = vshll.u32 920167782, %v321
        %v337 = vshrl.u32 1326507024, %v322
        %v338 = vor.u32 %v336, %v337
        %vm339 = vcmp.lt.s32.totalorder %v320, 1
        %vm340 = vcmp.lt.s32.totalorder %v320, 2
        %vm341 = vcmp.lt.s32.totalorder %v320, 3
        %vm342 = vcmp.lt.s32.totalorder %v320, 4
        %v343 = vsel %vm339, %v323, %v326
        %v344 = vsel %vm342, %v332, 2102212464
        %v345 = vsel %vm341, %v329, %v344
        %v346 = vsel %vm340, %v343, %v345
        %v347 = vsel %vm339, %v326, %v329
        %v348 = vsel %vm342, %v335, 920167782
        %v349 = vsel %vm341, %v332, %v348
        %v350 = vsel %vm340, %v347, %v349
        %v351 = vsel %vm339, %v329, %v332
        %v352 = vsel %vm342, %v338, 1326507024
        %v353 = vsel %vm341, %v335, %v352
        %v354 = vsel %vm340, %v351, %v353
        %v355 = vshll.u32 %v315, 8
        %v356 = vmul.u32.u64.compose %v355, %v354
        %v357 = vextract.low.u32 %v356
        %v358 = vextract.high.u32 %v356
        %v359 = vmul.u32.u64.compose %v355, %v350
        %v360 = vextract.low.u32 %v359
        %v361 = vextract.high.u32 %v359
        %v362 = vmul.u32 %v355, %v346
        %v363 = vadd.s32 %v358, %v360
        %vm364 = vc.u32 %v358, %v360
        %v365 = vadd.s32 %v361, 1
        %v366 = vsel %vm364, %v365, %v361
        %v367 = vadd.s32 %v362, %v366
        %v368 = vadd.s32 %v367, 536870912
        %v369 = vshrl.u32 %v368, 30
        %v370 = vshll.u32 %v369, 30
        %v371 = vsub.s32 %v367, %v370
        %vm372 = vcmp.lt.s32.totalorder %v371, 0
        %v373 = vsub.s32 0, %v371
        %v374 = vsel %vm372, %v373, %v371
        %v375 = vclz %v374
        %v376 = vsub.s32 %v375, 2
        %vm377 = vcmp.gt.s32.totalorder 0, %v376
        %v378 = vsel %vm377, 0, %v376
        %v379 = vsub.s32 32, %v378
        %v380 = vshll.u32 %v371, %v378
        %v381 = vshrl.u32 %v363, %v379
        %v382 = vor.u32 %v380, %v381
        %v383 = vsub.s32 4294967266, %v378
        %v384 = vadd.s32 %v383, 127
        %v385 = vshll.u32 %v384, 23
        %v386 = vor.u32 4788187, %v385
        %v387 = vand.u32 2147483647, %v386
        %v389 = vcvt.s32.f32 %v382
        %v390 = vmul.f32 %v389, %v387
        %v391 = vxor.u32 %v390, 2147483648
        %v392 = vsel %vm309, %v391, %v390
        %v393 = vsub.s32 4, %v369
        %v394 = vsel %vm309, %v393, %v369
        %v395 = vsel %vm308, %v202, %v392
        %v396 = vsel %vm308, 0, %v394
        %v397 = vcosq.f32.pop %v395
        %v398 = vsinq.f32.pop %v395
        %vm399 = vweird.f32 %v202
        %v400 = vand.u32 %v396, 3
        %vm401 = vcmp.lt.s32.totalorder %v400, 2
        %vm402 = vcmp.eq.s32.totalorder %v400, 0
        %v403 = vxor.u32 %v398, 2147483648
        %v404 = vsel %vm402, %v397, %v403
        %vm405 = vcmp.eq.s32.totalorder %v400, 2
        %v406 = vxor.u32 %v397, 2147483648
        %v407 = vsel %vm405, %v406, %v398
        %v408 = vsel %vm401, %v404, %v407
        %v409 = vsel %vm399, nan, %v408
        %v410 = vmul.f32 %v306, 2.0
        %v411 = vmul.f32 %v410, %v409
        %v412 = vmul.f32 %v410, %v306
        %v413 = vsub.f32 1.0, %v412
        %v414 = vmul.f32 %v411, 2.0
        %v415 = vmul.f32 %v414, %v413
        %v416 = vmul.f32 %v414, %v411
        %v417 = vsub.f32 1.0, %v416
        %v418 = vmul.f32 %v415, 2.0
        %v419 = vmul.f32 %v418, %v417
        %v420 = vmul.f32 %v418, %v415
        %v421 = vsub.f32 1.0, %v420
        %v423 = vcombine.high %v202, %v202
        %v425 = vunpack.c.l.s4 1983009808
        %v426 = vunpack.c.0.s8 %v425
        %v427 = vlaneseq
        %v428 = vshrl.u32 %v427, 7
        %v429 = vsub.s32 %v426, %v428
        %v430 = vrot.slane %v202, %v429
        %v432 = vunpack.c.l.s4 1983009808
        %v433 = vunpack.c.0.s8 %v432
        %v434 = vlaneseq
        %v435 = vshrl.u32 %v434, 7
        %v436 = vsub.s32 %v433, %v435
        %v437 = vrot.slane %v423, %v436
        %v438 = vcombine.high %v430, %v430
        %v439 = vcombine.high %v437, %v437
        %v445 = vcombine.low %v306, %v306
        %v447 = vunpack.c.l.s4 1983009808
        %v448 = vunpack.c.0.s8 %v447
        %v449 = vlaneseq
        %v450 = vshrl.u32 %v449, 7
        %v451 = vsub.s32 %v448, %v450
        %v452 = vrot.slane %v445, %v451
        %v454 = vunpack.c.l.s4 1983009808
        %v455 = vunpack.c.0.s8 %v454
        %v456 = vlaneseq
        %v457 = vshrl.u32 %v456, 7
        %v458 = vsub.s32 %v455, %v457
        %v459 = vrot.slane %v306, %v458
        %v460 = vcombine.high %v452, %v452
        %v461 = vcombine.high %v459, %v459
        %v467 = vcombine.high %v409, %v409
        %v469 = vunpack.c.l.s4 1983009808
        %v470 = vunpack.c.0.s8 %v469
        %v471 = vlaneseq
        %v472 = vshrl.u32 %v471, 7
        %v473 = vsub.s32 %v470, %v472
        %v474 = vrot.slane %v409, %v473
        %v476 = vunpack.c.l.s4 1983009808
        %v477 = vunpack.c.0.s8 %v476
        %v478 = vlaneseq
        %v479 = vshrl.u32 %v478, 7
        %v480 = vsub.s32 %v477, %v479
        %v481 = vrot.slane %v467, %v480
        %v482 = vcombine.low %v474, %v474
        %v483 = vcombine.low %v481, %v481
        %v489 = vcombine.low %v411, %v411
        %v491 = vunpack.c.l.s4 1983009808
        %v492 = vunpack.c.0.s8 %v491
        %v493 = vlaneseq
        %v494 = vshrl.u32 %v493, 7
        %v495 = vsub.s32 %v492, %v494
        %v496 = vrot.slane %v489, %v495
        %v498 = vunpack.c.l.s4 1983009808
        %v499 = vunpack.c.0.s8 %v498
        %v500 = vlaneseq
        %v501 = vshrl.u32 %v500, 7
        %v502 = vsub.s32 %v499, %v501
        %v503 = vrot.slane %v411, %v502
        %v504 = vcombine.low %v496, %v496
        %v505 = vcombine.low %v503, %v503
        %v511 = vcombine.high %v413, %v413
        %v513 = vunpack.c.l.s4 1983009808
        %v514 = vunpack.c.0.s8 %v513
        %v515 = vlaneseq
        %v516 = vshrl.u32 %v515, 7
        %v517 = vsub.s32 %v514, %v516
        %v518 = vrot.slane %v413, %v517
        %v520 = vunpack.c.l.s4 1983009808
        %v521 = vunpack.c.0.s8 %v520
        %v522 = vlaneseq
        %v523 = vshrl.u32 %v522, 7
        %v524 = vsub.s32 %v521, %v523
        %v525 = vrot.slane %v511, %v524
        %v526 = vcombine.high %v518, %v518
        %v527 = vcombine.high %v525, %v525
        %v533 = vcombine.low %v415, %v415
        %v535 = vunpack.c.l.s4 1983009808
        %v536 = vunpack.c.0.s8 %v535
        %v537 = vlaneseq
        %v538 = vshrl.u32 %v537, 7
        %v539 = vsub.s32 %v536, %v538
        %v540 = vrot.slane %v533, %v539
        %v542 = vunpack.c.l.s4 1983009808
        %v543 = vunpack.c.0.s8 %v542
        %v544 = vlaneseq
        %v545 = vshrl.u32 %v544, 7
        %v546 = vsub.s32 %v543, %v545
        %v547 = vrot.slane %v415, %v546
        %v548 = vcombine.high %v540, %v540
        %v549 = vcombine.high %v547, %v547
        %v555 = vcombine.high %v417, %v417
        %v557 = vunpack.c.l.s4 1983009808
        %v558 = vunpack.c.0.s8 %v557
        %v559 = vlaneseq
        %v560 = vshrl.u32 %v559, 7
        %v561 = vsub.s32 %v558, %v560
        %v562 = vrot.slane %v417, %v561
        %v564 = vunpack.c.l.s4 1983009808
        %v565 = vunpack.c.0.s8 %v564
        %v566 = vlaneseq
        %v567 = vshrl.u32 %v566, 7
        %v568 = vsub.s32 %v565, %v567
        %v569 = vrot.slane %v555, %v568
        %v570 = vcombine.low %v562, %v562
        %v571 = vcombine.low %v569, %v569
        %v577 = vcombine.low %v419, %v419
        %v579 = vunpack.c.l.s4 1983009808
        %v580 = vunpack.c.0.s8 %v579
        %v581 = vlaneseq
        %v582 = vshrl.u32 %v581, 7
        %v583 = vsub.s32 %v580, %v582
        %v584 = vrot.slane %v577, %v583
        %v586 = vunpack.c.l.s4 1983009808
        %v587 = vunpack.c.0.s8 %v586
        %v588 = vlaneseq
        %v589 = vshrl.u32 %v588, 7
        %v590 = vsub.s32 %v587, %v589
        %v591 = vrot.slane %v419, %v590
        %v592 = vcombine.low %v584, %v584
        %v593 = vcombine.low %v591, %v591
        %v599 = vcombine.high %v421, %v421
        %v601 = vunpack.c.l.s4 1983009808
        %v602 = vunpack.c.0.s8 %v601
        %v603 = vlaneseq
        %v604 = vshrl.u32 %v603, 7
        %v605 = vsub.s32 %v602, %v604
        %v606 = vrot.slane %v421, %v605
        %v608 = vunpack.c.l.s4 1983009808
        %v609 = vunpack.c.0.s8 %v608
        %v610 = vlaneseq
        %v611 = vshrl.u32 %v610, 7
        %v612 = vsub.s32 %v609, %v611
        %v613 = vrot.slane %v599, %v612
        %v614 = vcombine.high %v606, %v606
        %v615 = vcombine.high %v613, %v613
        %vm620 = vcmask 1041408
        %v621 = vsel %vm620, %v430, %v452
        %v622 = vsel %vm620, %v438, %v460
        %v623 = vsel %vm620, %v437, %v459
        %v624 = vsel %vm620, %v439, %v461
        %vm625 = vcmask 1043456
        %v626 = vsel %vm625, %v621, %v482
        %v627 = vsel %vm625, %v622, %v474
        %v628 = vsel %vm625, %v623, %v483
        %v629 = vsel %vm625, %v624, %v481
        %vm630 = vcmask 1045504
        %v631 = vsel %vm630, %v626, %v504
        %v632 = vsel %vm630, %v627, %v496
        %v633 = vsel %vm630, %v628, %v505
        %v634 = vsel %vm630, %v629, %v503
        %v635 = vsel %vm620, %v518, %v540
        %v636 = vsel %vm620, %v526, %v548
        %v637 = vsel %vm620, %v525, %v547
        %v638 = vsel %vm620, %v527, %v549
        %v639 = vsel %vm625, %v635, %v570
        %v640 = vsel %vm625, %v636, %v562
        %v641 = vsel %vm625, %v637, %v571
        %v642 = vsel %vm625, %v638, %v569
        %v643 = vsel %vm630, %v639, %v592
        %v644 = vsel %vm630, %v640, %v584
        %v645 = vsel %vm630, %v641, %v593
        %v646 = vsel %vm630, %v642, %v591
        %v647 = vsel %vm620, %v606, 0.0
        %v648 = vsel %vm620, %v614, 0.0
        %v649 = vsel %vm620, %v613, 0.0
        %v650 = vsel %vm620, %v615, 0.0
        %v651 = vld [vmem:[#allocation2] sm:$0xff]
        %v652 = vld [vmem:[#allocation2 + $0x8] sm:$0xff]
        %v653 = vld [vmem:[#allocation2 + $0x10] sm:$0xff]
        %v654 = vld [vmem:[#allocation2 + $0x18] sm:$0xff]
        %v655 = vld [vmem:[#allocation4] sm:$0xff]
        %v656 = vld [vmem:[#allocation4 + $0x8] sm:$0xff]
        %v657 = vld [vmem:[#allocation4 + $0x10] sm:$0xff]
        %v658 = vld [vmem:[#allocation4 + $0x18] sm:$0xff]
        %660 = vset.pattern.permute.xlu0 0
        %661 = vperm.xlu0 %660, %v655
        %v662 = vpop.permute.xlu0 %661
        %665 = vset.pattern.permute.xlu0 0
        %666 = vperm.xlu0 %665, %v656
        %v667 = vpop.permute.xlu0 %666
        %670 = vset.pattern.permute.xlu0 0
        %671 = vperm.xlu0 %670, %v657
        %v672 = vpop.permute.xlu0 %671
        %675 = vset.pattern.permute.xlu0 0
        %676 = vperm.xlu0 %675, %v658
        %v677 = vpop.permute.xlu0 %676
        %vm679 = vcmask 261120
        %v681 = vsel %vm679, %v651, 0
        %v684 = vsel %vm679, %v652, 0
        %v687 = vsel %vm679, %v653, 0
        %v690 = vsel %vm679, %v654, 0
        %692 = vmatprep.subr.mxu0 0.0
        %693 = vmatpush1.msra.mxu0 0.0
        %694 = vmatprep.subr.mxu0 0.0
        %695 = vmatpush1.msra.mxu0 0.0
        %696 = vmatprep.subr.mxu0 0.0
        %697 = vmatpush1.msra.mxu0 0.0
        %698 = vmatprep.subr.mxu0 0.0
        %699 = vmatpush1.msra.mxu0 0.0
        %700 = vmatprep.subr.mxu0 0.0
        %701 = vmatpush1.msra.mxu0 0.0
        %702 = vmatprep.subr.mxu0 0.0
        %703 = vmatpush1.msra.mxu0 0.0
        %704 = vmatprep.subr.mxu0 0.0
        %705 = vmatpush1.msra.mxu0 0.0
        %706 = vmatprep.subr.mxu0 0.0
        %707 = vmatpush1.msra.mxu0 0.0
        %708 = vmatprep.subr.mxu0 0.0
        %709 = vmatpush1.msra.mxu0 0.0
        %710 = vmatprep.subr.mxu0 0.0
        %711 = vmatpush1.msra.mxu0 0.0
        %712 = vmatprep.subr.mxu0 0.0
        %713 = vmatpush1.msra.mxu0 0.0
        %714 = vmatprep.subr.mxu0 0.0
        %715 = vmatpush1.msra.mxu0 0.0
        %716 = vmatprep.subr.mxu0 0.0
        %717 = vmatpush1.msra.mxu0 0.0
        %718 = vmatprep.subr.mxu0 %v648
        %719 = vmatpush1.msra.mxu0 %v647
        %720 = vmatprep.subr.mxu0 %v644
        %721 = vmatpush1.msra.mxu0 %v643
        %722 = vmatprep.subr.mxu0 %v632
        %723 = vmatpush1.msra.mxu0 %v631
        %724 = vmatprep.subr.mxu0 0.0
        %725 = vmatpush2.msra.mxu0 0.0
        %726 = vmatprep.subr.mxu0 0.0
        %727 = vmatpush2.msra.mxu0 0.0
        %728 = vmatprep.subr.mxu0 0.0
        %729 = vmatpush2.msra.mxu0 0.0
        %730 = vmatprep.subr.mxu0 0.0
        %731 = vmatpush2.msra.mxu0 0.0
        %732 = vmatprep.subr.mxu0 0.0
        %733 = vmatpush2.msra.mxu0 0.0
        %734 = vmatprep.subr.mxu0 0.0
        %735 = vmatpush2.msra.mxu0 0.0
        %736 = vmatprep.subr.mxu0 0.0
        %737 = vmatpush2.msra.mxu0 0.0
        %738 = vmatprep.subr.mxu0 0.0
        %739 = vmatpush2.msra.mxu0 0.0
        %740 = vmatprep.subr.mxu0 0.0
        %741 = vmatpush2.msra.mxu0 0.0
        %742 = vmatprep.subr.mxu0 0.0
        %743 = vmatpush2.msra.mxu0 0.0
        %744 = vmatprep.subr.mxu0 0.0
        %745 = vmatpush2.msra.mxu0 0.0
        %746 = vmatprep.subr.mxu0 0.0
        %747 = vmatpush2.msra.mxu0 0.0
        %748 = vmatprep.subr.mxu0 0.0
        %749 = vmatpush2.msra.mxu0 0.0
        %750 = vmatprep.subr.mxu0 0.0
        %751 = vmatpush2.msra.mxu0 0.0
        %752 = vmatprep.subr.mxu0 0.0
        %753 = vmatpush2.msra.mxu0 0.0
        %754 = vmatprep.subr.mxu0 0.0
        %755 = vmatpush2.msra.mxu0 0.0
        %756 = vmatprep.mubr.f32.mxu0 0.0
        %757 = vmatmul.mubr.f32.gmra.mxu0 %v681
        %v758 = vpop.f32.mrf.mxu0
        %v759 = vadd.f32 %v662, %v758
        %v760 = vpop.f32.mrf.mxu0
        %v761 = vadd.f32 %v662, %v760
        %762 = vmatprep.mubr.f32.mxu0 0.0
        %763 = vmatmul.mubr.f32.gmra.mxu0 %v684
        %v764 = vpop.f32.mrf.mxu0
        %v765 = vadd.f32 %v667, %v764
        %v766 = vpop.f32.mrf.mxu0
        %v767 = vadd.f32 %v667, %v766
        %768 = vmatprep.mubr.f32.mxu0 0.0
        %769 = vmatmul.mubr.f32.gmra.mxu0 %v687
        %v770 = vpop.f32.mrf.mxu0
        %v771 = vadd.f32 %v672, %v770
        %v772 = vpop.f32.mrf.mxu0
        %v773 = vadd.f32 %v672, %v772
        %774 = vmatprep.mubr.f32.mxu0 0.0
        %775 = vmatmul.mubr.f32.gmra.mxu0 %v690
        %v776 = vpop.f32.mrf.mxu0
        %v777 = vadd.f32 %v677, %v776
        %v778 = vpop.f32.mrf.mxu0
        %v779 = vadd.f32 %v677, %v778
        %780 = vdwg.mxu0
        %781 = vmatprep.subr.mxu0 0.0
        %782 = vmatpush1.msra.mxu0 0.0
        %783 = vmatprep.subr.mxu0 0.0
        %784 = vmatpush1.msra.mxu0 0.0
        %785 = vmatprep.subr.mxu0 0.0
        %786 = vmatpush1.msra.mxu0 0.0
        %787 = vmatprep.subr.mxu0 0.0
        %788 = vmatpush1.msra.mxu0 0.0
        %789 = vmatprep.subr.mxu0 0.0
        %790 = vmatpush1.msra.mxu0 0.0
        %791 = vmatprep.subr.mxu0 0.0
        %792 = vmatpush1.msra.mxu0 0.0
        %793 = vmatprep.subr.mxu0 0.0
        %794 = vmatpush1.msra.mxu0 0.0
        %795 = vmatprep.subr.mxu0 0.0
        %796 = vmatpush1.msra.mxu0 0.0
        %797 = vmatprep.subr.mxu0 0.0
        %798 = vmatpush1.msra.mxu0 0.0
        %799 = vmatprep.subr.mxu0 0.0
        %800 = vmatpush1.msra.mxu0 0.0
        %801 = vmatprep.subr.mxu0 0.0
        %802 = vmatpush1.msra.mxu0 0.0
        %803 = vmatprep.subr.mxu0 0.0
        %804 = vmatpush1.msra.mxu0 0.0
        %805 = vmatprep.subr.mxu0 0.0
        %806 = vmatpush1.msra.mxu0 0.0
        %807 = vmatprep.subr.mxu0 %v650
        %808 = vmatpush1.msra.mxu0 %v649
        %809 = vmatprep.subr.mxu0 %v646
        %810 = vmatpush1.msra.mxu0 %v645
        %811 = vmatprep.subr.mxu0 %v634
        %812 = vmatpush1.msra.mxu0 %v633
        %813 = vmatprep.subr.mxu0 0.0
        %814 = vmatpush2.msra.mxu0 0.0
        %815 = vmatprep.subr.mxu0 0.0
        %816 = vmatpush2.msra.mxu0 0.0
        %817 = vmatprep.subr.mxu0 0.0
        %818 = vmatpush2.msra.mxu0 0.0
        %819 = vmatprep.subr.mxu0 0.0
        %820 = vmatpush2.msra.mxu0 0.0
        %821 = vmatprep.subr.mxu0 0.0
        %822 = vmatpush2.msra.mxu0 0.0
        %823 = vmatprep.subr.mxu0 0.0
        %824 = vmatpush2.msra.mxu0 0.0
        %825 = vmatprep.subr.mxu0 0.0
        %826 = vmatpush2.msra.mxu0 0.0
        %827 = vmatprep.subr.mxu0 0.0
        %828 = vmatpush2.msra.mxu0 0.0
        %829 = vmatprep.subr.mxu0 0.0
        %830 = vmatpush2.msra.mxu0 0.0
        %831 = vmatprep.subr.mxu0 0.0
        %832 = vmatpush2.msra.mxu0 0.0
        %833 = vmatprep.subr.mxu0 0.0
        %834 = vmatpush2.msra.mxu0 0.0
        %835 = vmatprep.subr.mxu0 0.0
        %836 = vmatpush2.msra.mxu0 0.0
        %837 = vmatprep.subr.mxu0 0.0
        %838 = vmatpush2.msra.mxu0 0.0
        %839 = vmatprep.subr.mxu0 0.0
        %840 = vmatpush2.msra.mxu0 0.0
        %841 = vmatprep.subr.mxu0 0.0
        %842 = vmatpush2.msra.mxu0 0.0
        %843 = vmatprep.subr.mxu0 0.0
        %844 = vmatpush2.msra.mxu0 0.0
        %845 = vmatprep.mubr.f32.mxu0 0.0
        %846 = vmatmul.mubr.f32.gmra.mxu0 %v681
        %v847 = vpop.f32.mrf.mxu0
        %v848 = vadd.f32 %v662, %v847
        %v849 = vpop.f32.mrf.mxu0
        %v850 = vadd.f32 %v662, %v849
        %851 = vmatprep.mubr.f32.mxu0 0.0
        %852 = vmatmul.mubr.f32.gmra.mxu0 %v684
        %v853 = vpop.f32.mrf.mxu0
        %v854 = vadd.f32 %v667, %v853
        %v855 = vpop.f32.mrf.mxu0
        %v856 = vadd.f32 %v667, %v855
        %857 = vmatprep.mubr.f32.mxu0 0.0
        %858 = vmatmul.mubr.f32.gmra.mxu0 %v687
        %v859 = vpop.f32.mrf.mxu0
        %v860 = vadd.f32 %v672, %v859
        %v861 = vpop.f32.mrf.mxu0
        %v862 = vadd.f32 %v672, %v861
        %863 = vmatprep.mubr.f32.mxu0 0.0
        %864 = vmatmul.mubr.f32.gmra.mxu0 %v690
        %v865 = vpop.f32.mrf.mxu0
        %v866 = vadd.f32 %v677, %v865
        %v867 = vpop.f32.mrf.mxu0
        %v868 = vadd.f32 %v677, %v867
        %869 = vdwg.mxu0
        %v870 = vmin.f32 %v759, 20.0
        %v871 = vmin.f32 %v761, 20.0
        %v872 = vmin.f32 %v848, 20.0
        %v873 = vmin.f32 %v850, 20.0
        %v874 = vmin.f32 %v765, 20.0
        %v875 = vmin.f32 %v767, 20.0
        %v876 = vmin.f32 %v854, 20.0
        %v877 = vmin.f32 %v856, 20.0
        %v878 = vmin.f32 %v771, 20.0
        %v879 = vmin.f32 %v773, 20.0
        %v880 = vmin.f32 %v860, 20.0
        %v881 = vmin.f32 %v862, 20.0
        %v882 = vmin.f32 %v777, 20.0
        %v883 = vmin.f32 %v779, 20.0
        %v884 = vmin.f32 %v866, 20.0
        %v885 = vmin.f32 %v868, 20.0
        %v886 = vmul.f32 %v870, 1.442695
        %v887 = vpow.pop %v886
        %v888 = vmul.f32 %v871, 1.442695
        %v889 = vpow.pop %v888
        %v890 = vmul.f32 %v872, 1.442695
        %v891 = vpow.pop %v890
        %v892 = vmul.f32 %v873, 1.442695
        %v893 = vpow.pop %v892
        %v894 = vmul.f32 %v874, 1.442695
        %v895 = vpow.pop %v894
        %v896 = vmul.f32 %v875, 1.442695
        %v897 = vpow.pop %v896
        %v898 = vmul.f32 %v876, 1.442695
        %v899 = vpow.pop %v898
        %v900 = vmul.f32 %v877, 1.442695
        %v901 = vpow.pop %v900
        %v902 = vmul.f32 %v878, 1.442695
        %v903 = vpow.pop %v902
        %v904 = vmul.f32 %v879, 1.442695
        %v905 = vpow.pop %v904
        %v906 = vmul.f32 %v880, 1.442695
        %v907 = vpow.pop %v906
        %v908 = vmul.f32 %v881, 1.442695
        %v909 = vpow.pop %v908
        %v910 = vmul.f32 %v882, 1.442695
        %v911 = vpow.pop %v910
        %v912 = vmul.f32 %v883, 1.442695
        %v913 = vpow.pop %v912
        %v914 = vmul.f32 %v884, 1.442695
        %v915 = vpow.pop %v914
        %v916 = vmul.f32 %v885, 1.442695
        %v917 = vpow.pop %v916
        %v918 = vadd.f32 %v887, 1.0
        %v919 = vadd.f32 %v889, 1.0
        %v920 = vadd.f32 %v891, 1.0
        %v921 = vadd.f32 %v893, 1.0
        %v922 = vadd.f32 %v895, 1.0
        %v923 = vadd.f32 %v897, 1.0
        %v924 = vadd.f32 %v899, 1.0
        %v925 = vadd.f32 %v901, 1.0
        %v926 = vadd.f32 %v903, 1.0
        %v927 = vadd.f32 %v905, 1.0
        %v928 = vadd.f32 %v907, 1.0
        %v929 = vadd.f32 %v909, 1.0
        %v930 = vadd.f32 %v911, 1.0
        %v931 = vadd.f32 %v913, 1.0
        %v932 = vadd.f32 %v915, 1.0
        %v933 = vadd.f32 %v917, 1.0
        %v934 = vlog2.pop %v918
        %v935 = vmul.f32 %v934, 0.6931472
        %v936 = vlog2.pop %v919
        %v937 = vmul.f32 %v936, 0.6931472
        %v938 = vlog2.pop %v920
        %v939 = vmul.f32 %v938, 0.6931472
        %v940 = vlog2.pop %v921
        %v941 = vmul.f32 %v940, 0.6931472
        %v942 = vlog2.pop %v922
        %v943 = vmul.f32 %v942, 0.6931472
        %v944 = vlog2.pop %v923
        %v945 = vmul.f32 %v944, 0.6931472
        %v946 = vlog2.pop %v924
        %v947 = vmul.f32 %v946, 0.6931472
        %v948 = vlog2.pop %v925
        %v949 = vmul.f32 %v948, 0.6931472
        %v950 = vlog2.pop %v926
        %v951 = vmul.f32 %v950, 0.6931472
        %v952 = vlog2.pop %v927
        %v953 = vmul.f32 %v952, 0.6931472
        %v954 = vlog2.pop %v928
        %v955 = vmul.f32 %v954, 0.6931472
        %v956 = vlog2.pop %v929
        %v957 = vmul.f32 %v956, 0.6931472
        %v958 = vlog2.pop %v930
        %v959 = vmul.f32 %v958, 0.6931472
        %v960 = vlog2.pop %v931
        %v961 = vmul.f32 %v960, 0.6931472
        %v962 = vlog2.pop %v932
        %v963 = vmul.f32 %v962, 0.6931472
        %v964 = vlog2.pop %v933
        %v965 = vmul.f32 %v964, 0.6931472
        %vm966 = vcmp.gt.f32.partialorder %v759, 20.0
        %vm967 = vcmp.gt.f32.partialorder %v761, 20.0
        %vm968 = vcmp.gt.f32.partialorder %v848, 20.0
        %vm969 = vcmp.gt.f32.partialorder %v850, 20.0
        %vm970 = vcmp.gt.f32.partialorder %v765, 20.0
        %vm971 = vcmp.gt.f32.partialorder %v767, 20.0
        %vm972 = vcmp.gt.f32.partialorder %v854, 20.0
        %vm973 = vcmp.gt.f32.partialorder %v856, 20.0
        %vm974 = vcmp.gt.f32.partialorder %v771, 20.0
        %vm975 = vcmp.gt.f32.partialorder %v773, 20.0
        %vm976 = vcmp.gt.f32.partialorder %v860, 20.0
        %vm977 = vcmp.gt.f32.partialorder %v862, 20.0
        %vm978 = vcmp.gt.f32.partialorder %v777, 20.0
        %vm979 = vcmp.gt.f32.partialorder %v779, 20.0
        %vm980 = vcmp.gt.f32.partialorder %v866, 20.0
        %vm981 = vcmp.gt.f32.partialorder %v868, 20.0
        %v982 = vsel %vm966, %v759, %v935
        %v983 = vsel %vm967, %v761, %v937
        %v984 = vsel %vm968, %v848, %v939
        %v985 = vsel %vm969, %v850, %v941
        %v986 = vsel %vm970, %v765, %v943
        %v987 = vsel %vm971, %v767, %v945
        %v988 = vsel %vm972, %v854, %v947
        %v989 = vsel %vm973, %v856, %v949
        %v990 = vsel %vm974, %v771, %v951
        %v991 = vsel %vm975, %v773, %v953
        %v992 = vsel %vm976, %v860, %v955
        %v993 = vsel %vm977, %v862, %v957
        %v994 = vsel %vm978, %v777, %v959
        %v995 = vsel %vm979, %v779, %v961
        %v996 = vsel %vm980, %v866, %v963
        %v997 = vsel %vm981, %v868, %v965
        %s998 = scalar_lea.vmem [#allocation2], 32
        %v999 = vld [vmem:[%s998] sm:$0xff]
        %v1000 = vld [vmem:[%s998 + $0x8] sm:$0xff]
        %v1001 = vld [vmem:[%s998 + $0x10] sm:$0xff]
        %v1002 = vld [vmem:[%s998 + $0x18] sm:$0xff]
        %s1003 = scalar_lea.vmem [#allocation4], 32
        %v1004 = vld [vmem:[%s1003] sm:$0xff]
        %v1005 = vld [vmem:[%s1003 + $0x8] sm:$0xff]
        %v1006 = vld [vmem:[%s1003 + $0x10] sm:$0xff]
        %v1007 = vld [vmem:[%s1003 + $0x18] sm:$0xff]
        %1009 = vset.pattern.permute.xlu0 0
        %1010 = vperm.xlu0 %1009, %v1004
        %v1011 = vpop.permute.xlu0 %1010
        %1014 = vset.pattern.permute.xlu0 0
        %1015 = vperm.xlu0 %1014, %v1005
        %v1016 = vpop.permute.xlu0 %1015
        %1019 = vset.pattern.permute.xlu0 0
        %1020 = vperm.xlu0 %1019, %v1006
        %v1021 = vpop.permute.xlu0 %1020
        %1024 = vset.pattern.permute.xlu0 0
        %1025 = vperm.xlu0 %1024, %v1007
        %v1026 = vpop.permute.xlu0 %1025
        %v1029 = vsel %vm679, %v999, 0
        %v1032 = vsel %vm679, %v1000, 0
        %v1035 = vsel %vm679, %v1001, 0
        %v1038 = vsel %vm679, %v1002, 0
        %1040 = vmatprep.subr.mxu0 0.0
        %1041 = vmatpush1.msra.mxu0 0.0
        %1042 = vmatprep.subr.mxu0 0.0
        %1043 = vmatpush1.msra.mxu0 0.0
        %1044 = vmatprep.subr.mxu0 0.0
        %1045 = vmatpush1.msra.mxu0 0.0
        %1046 = vmatprep.subr.mxu0 0.0
        %1047 = vmatpush1.msra.mxu0 0.0
        %1048 = vmatprep.subr.mxu0 0.0
        %1049 = vmatpush1.msra.mxu0 0.0
        %1050 = vmatprep.subr.mxu0 0.0
        %1051 = vmatpush1.msra.mxu0 0.0
        %1052 = vmatprep.subr.mxu0 0.0
        %1053 = vmatpush1.msra.mxu0 0.0
        %1054 = vmatprep.subr.mxu0 0.0
        %1055 = vmatpush1.msra.mxu0 0.0
        %1056 = vmatprep.subr.mxu0 0.0
        %1057 = vmatpush1.msra.mxu0 0.0
        %1058 = vmatprep.subr.mxu0 0.0
        %1059 = vmatpush1.msra.mxu0 0.0
        %1060 = vmatprep.subr.mxu0 0.0
        %1061 = vmatpush1.msra.mxu0 0.0
        %1062 = vmatprep.subr.mxu0 0.0
        %1063 = vmatpush1.msra.mxu0 0.0
        %1064 = vmatprep.subr.mxu0 %v995
        %1065 = vmatpush1.msra.mxu0 %v994
        %1066 = vmatprep.subr.mxu0 %v991
        %1067 = vmatpush1.msra.mxu0 %v990
        %1068 = vmatprep.subr.mxu0 %v987
        %1069 = vmatpush1.msra.mxu0 %v986
        %1070 = vmatprep.subr.mxu0 %v983
        %1071 = vmatpush1.msra.mxu0 %v982
        %1072 = vmatprep.subr.mxu0 0.0
        %1073 = vmatpush2.msra.mxu0 0.0
        %1074 = vmatprep.subr.mxu0 0.0
        %1075 = vmatpush2.msra.mxu0 0.0
        %1076 = vmatprep.subr.mxu0 0.0
        %1077 = vmatpush2.msra.mxu0 0.0
        %1078 = vmatprep.subr.mxu0 0.0
        %1079 = vmatpush2.msra.mxu0 0.0
        %1080 = vmatprep.subr.mxu0 0.0
        %1081 = vmatpush2.msra.mxu0 0.0
        %1082 = vmatprep.subr.mxu0 0.0
        %1083 = vmatpush2.msra.mxu0 0.0
        %1084 = vmatprep.subr.mxu0 0.0
        %1085 = vmatpush2.msra.mxu0 0.0
        %1086 = vmatprep.subr.mxu0 0.0
        %1087 = vmatpush2.msra.mxu0 0.0
        %1088 = vmatprep.subr.mxu0 0.0
        %1089 = vmatpush2.msra.mxu0 0.0
        %1090 = vmatprep.subr.mxu0 0.0
        %1091 = vmatpush2.msra.mxu0 0.0
        %1092 = vmatprep.subr.mxu0 0.0
        %1093 = vmatpush2.msra.mxu0 0.0
        %1094 = vmatprep.subr.mxu0 0.0
        %1095 = vmatpush2.msra.mxu0 0.0
        %1096 = vmatprep.subr.mxu0 0.0
        %1097 = vmatpush2.msra.mxu0 0.0
        %1098 = vmatprep.subr.mxu0 0.0
        %1099 = vmatpush2.msra.mxu0 0.0
        %1100 = vmatprep.subr.mxu0 0.0
        %1101 = vmatpush2.msra.mxu0 0.0
        %1102 = vmatprep.subr.mxu0 0.0
        %1103 = vmatpush2.msra.mxu0 0.0
        %1104 = vmatprep.mubr.f32.mxu0 0.0
        %1105 = vmatmul.mubr.f32.gmra.mxu0 %v1029
        %v1106 = vpop.f32.mrf.mxu0
        %v1107 = vadd.f32 %v1011, %v1106
        %v1108 = vpop.f32.mrf.mxu0
        %v1109 = vadd.f32 %v1011, %v1108
        %1110 = vmatprep.mubr.f32.mxu0 0.0
        %1111 = vmatmul.mubr.f32.gmra.mxu0 %v1032
        %v1112 = vpop.f32.mrf.mxu0
        %v1113 = vadd.f32 %v1016, %v1112
        %v1114 = vpop.f32.mrf.mxu0
        %v1115 = vadd.f32 %v1016, %v1114
        %1116 = vmatprep.mubr.f32.mxu0 0.0
        %1117 = vmatmul.mubr.f32.gmra.mxu0 %v1035
        %v1118 = vpop.f32.mrf.mxu0
        %v1119 = vadd.f32 %v1021, %v1118
        %v1120 = vpop.f32.mrf.mxu0
        %v1121 = vadd.f32 %v1021, %v1120
        %1122 = vmatprep.mubr.f32.mxu0 0.0
        %1123 = vmatmul.mubr.f32.gmra.mxu0 %v1038
        %v1124 = vpop.f32.mrf.mxu0
        %v1125 = vadd.f32 %v1026, %v1124
        %v1126 = vpop.f32.mrf.mxu0
        %v1127 = vadd.f32 %v1026, %v1126
        %1128 = vdwg.mxu0
        %1129 = vmatprep.subr.mxu0 0.0
        %1130 = vmatpush1.msra.mxu0 0.0
        %1131 = vmatprep.subr.mxu0 0.0
        %1132 = vmatpush1.msra.mxu0 0.0
        %1133 = vmatprep.subr.mxu0 0.0
        %1134 = vmatpush1.msra.mxu0 0.0
        %1135 = vmatprep.subr.mxu0 0.0
        %1136 = vmatpush1.msra.mxu0 0.0
        %1137 = vmatprep.subr.mxu0 0.0
        %1138 = vmatpush1.msra.mxu0 0.0
        %1139 = vmatprep.subr.mxu0 0.0
        %1140 = vmatpush1.msra.mxu0 0.0
        %1141 = vmatprep.subr.mxu0 0.0
        %1142 = vmatpush1.msra.mxu0 0.0
        %1143 = vmatprep.subr.mxu0 0.0
        %1144 = vmatpush1.msra.mxu0 0.0
        %1145 = vmatprep.subr.mxu0 0.0
        %1146 = vmatpush1.msra.mxu0 0.0
        %1147 = vmatprep.subr.mxu0 0.0
        %1148 = vmatpush1.msra.mxu0 0.0
        %1149 = vmatprep.subr.mxu0 0.0
        %1150 = vmatpush1.msra.mxu0 0.0
        %1151 = vmatprep.subr.mxu0 0.0
        %1152 = vmatpush1.msra.mxu0 0.0
        %1153 = vmatprep.subr.mxu0 %v997
        %1154 = vmatpush1.msra.mxu0 %v996
        %1155 = vmatprep.subr.mxu0 %v993
        %1156 = vmatpush1.msra.mxu0 %v992
        %1157 = vmatprep.subr.mxu0 %v989
        %1158 = vmatpush1.msra.mxu0 %v988
        %1159 = vmatprep.subr.mxu0 %v985
        %1160 = vmatpush1.msra.mxu0 %v984
        %1161 = vmatprep.subr.mxu0 0.0
        %1162 = vmatpush2.msra.mxu0 0.0
        %1163 = vmatprep.subr.mxu0 0.0
        %1164 = vmatpush2.msra.mxu0 0.0
        %1165 = vmatprep.subr.mxu0 0.0
        %1166 = vmatpush2.msra.mxu0 0.0
        %1167 = vmatprep.subr.mxu0 0.0
        %1168 = vmatpush2.msra.mxu0 0.0
        %1169 = vmatprep.subr.mxu0 0.0
        %1170 = vmatpush2.msra.mxu0 0.0
        %1171 = vmatprep.subr.mxu0 0.0
        %1172 = vmatpush2.msra.mxu0 0.0
        %1173 = vmatprep.subr.mxu0 0.0
        %1174 = vmatpush2.msra.mxu0 0.0
        %1175 = vmatprep.subr.mxu0 0.0
        %1176 = vmatpush2.msra.mxu0 0.0
        %1177 = vmatprep.subr.mxu0 0.0
        %1178 = vmatpush2.msra.mxu0 0.0
        %1179 = vmatprep.subr.mxu0 0.0
        %1180 = vmatpush2.msra.mxu0 0.0
        %1181 = vmatprep.subr.mxu0 0.0
        %1182 = vmatpush2.msra.mxu0 0.0
        %1183 = vmatprep.subr.mxu0 0.0
        %1184 = vmatpush2.msra.mxu0 0.0
        %1185 = vmatprep.subr.mxu0 0.0
        %1186 = vmatpush2.msra.mxu0 0.0
        %1187 = vmatprep.subr.mxu0 0.0
        %1188 = vmatpush2.msra.mxu0 0.0
        %1189 = vmatprep.subr.mxu0 0.0
        %1190 = vmatpush2.msra.mxu0 0.0
        %1191 = vmatprep.subr.mxu0 0.0
        %1192 = vmatpush2.msra.mxu0 0.0
        %1193 = vmatprep.mubr.f32.mxu0 0.0
        %1194 = vmatmul.mubr.f32.gmra.mxu0 %v1029
        %v1195 = vpop.f32.mrf.mxu0
        %v1196 = vadd.f32 %v1011, %v1195
        %v1197 = vpop.f32.mrf.mxu0
        %v1198 = vadd.f32 %v1011, %v1197
        %1199 = vmatprep.mubr.f32.mxu0 0.0
        %1200 = vmatmul.mubr.f32.gmra.mxu0 %v1032
        %v1201 = vpop.f32.mrf.mxu0
        %v1202 = vadd.f32 %v1016, %v1201
        %v1203 = vpop.f32.mrf.mxu0
        %v1204 = vadd.f32 %v1016, %v1203
        %1205 = vmatprep.mubr.f32.mxu0 0.0
        %1206 = vmatmul.mubr.f32.gmra.mxu0 %v1035
        %v1207 = vpop.f32.mrf.mxu0
        %v1208 = vadd.f32 %v1021, %v1207
        %v1209 = vpop.f32.mrf.mxu0
        %v1210 = vadd.f32 %v1021, %v1209
        %1211 = vmatprep.mubr.f32.mxu0 0.0
        %1212 = vmatmul.mubr.f32.gmra.mxu0 %v1038
        %v1213 = vpop.f32.mrf.mxu0
        %v1214 = vadd.f32 %v1026, %v1213
        %v1215 = vpop.f32.mrf.mxu0
        %v1216 = vadd.f32 %v1026, %v1215
        %1217 = vdwg.mxu0
        %v1218 = vmin.f32 %v1107, 20.0
        %v1219 = vmin.f32 %v1109, 20.0
        %v1220 = vmin.f32 %v1196, 20.0
        %v1221 = vmin.f32 %v1198, 20.0
        %v1222 = vmin.f32 %v1113, 20.0
        %v1223 = vmin.f32 %v1115, 20.0
        %v1224 = vmin.f32 %v1202, 20.0
        %v1225 = vmin.f32 %v1204, 20.0
        %v1226 = vmin.f32 %v1119, 20.0
        %v1227 = vmin.f32 %v1121, 20.0
        %v1228 = vmin.f32 %v1208, 20.0
        %v1229 = vmin.f32 %v1210, 20.0
        %v1230 = vmin.f32 %v1125, 20.0
        %v1231 = vmin.f32 %v1127, 20.0
        %v1232 = vmin.f32 %v1214, 20.0
        %v1233 = vmin.f32 %v1216, 20.0
        %v1234 = vmul.f32 %v1218, 1.442695
        %v1235 = vpow.pop %v1234
        %v1236 = vmul.f32 %v1219, 1.442695
        %v1237 = vpow.pop %v1236
        %v1238 = vmul.f32 %v1220, 1.442695
        %v1239 = vpow.pop %v1238
        %v1240 = vmul.f32 %v1221, 1.442695
        %v1241 = vpow.pop %v1240
        %v1242 = vmul.f32 %v1222, 1.442695
        %v1243 = vpow.pop %v1242
        %v1244 = vmul.f32 %v1223, 1.442695
        %v1245 = vpow.pop %v1244
        %v1246 = vmul.f32 %v1224, 1.442695
        %v1247 = vpow.pop %v1246
        %v1248 = vmul.f32 %v1225, 1.442695
        %v1249 = vpow.pop %v1248
        %v1250 = vmul.f32 %v1226, 1.442695
        %v1251 = vpow.pop %v1250
        %v1252 = vmul.f32 %v1227, 1.442695
        %v1253 = vpow.pop %v1252
        %v1254 = vmul.f32 %v1228, 1.442695
        %v1255 = vpow.pop %v1254
        %v1256 = vmul.f32 %v1229, 1.442695
        %v1257 = vpow.pop %v1256
        %v1258 = vmul.f32 %v1230, 1.442695
        %v1259 = vpow.pop %v1258
        %v1260 = vmul.f32 %v1231, 1.442695
        %v1261 = vpow.pop %v1260
        %v1262 = vmul.f32 %v1232, 1.442695
        %v1263 = vpow.pop %v1262
        %v1264 = vmul.f32 %v1233, 1.442695
        %v1265 = vpow.pop %v1264
        %v1266 = vadd.f32 %v1235, 1.0
        %v1267 = vadd.f32 %v1237, 1.0
        %v1268 = vadd.f32 %v1239, 1.0
        %v1269 = vadd.f32 %v1241, 1.0
        %v1270 = vadd.f32 %v1243, 1.0
        %v1271 = vadd.f32 %v1245, 1.0
        %v1272 = vadd.f32 %v1247, 1.0
        %v1273 = vadd.f32 %v1249, 1.0
        %v1274 = vadd.f32 %v1251, 1.0
        %v1275 = vadd.f32 %v1253, 1.0
        %v1276 = vadd.f32 %v1255, 1.0
        %v1277 = vadd.f32 %v1257, 1.0
        %v1278 = vadd.f32 %v1259, 1.0
        %v1279 = vadd.f32 %v1261, 1.0
        %v1280 = vadd.f32 %v1263, 1.0
        %v1281 = vadd.f32 %v1265, 1.0
        %v1282 = vlog2.pop %v1266
        %v1283 = vmul.f32 %v1282, 0.6931472
        %v1284 = vlog2.pop %v1267
        %v1285 = vmul.f32 %v1284, 0.6931472
        %v1286 = vlog2.pop %v1268
        %v1287 = vmul.f32 %v1286, 0.6931472
        %v1288 = vlog2.pop %v1269
        %v1289 = vmul.f32 %v1288, 0.6931472
        %v1290 = vlog2.pop %v1270
        %v1291 = vmul.f32 %v1290, 0.6931472
        %v1292 = vlog2.pop %v1271
        %v1293 = vmul.f32 %v1292, 0.6931472
        %v1294 = vlog2.pop %v1272
        %v1295 = vmul.f32 %v1294, 0.6931472
        %v1296 = vlog2.pop %v1273
        %v1297 = vmul.f32 %v1296, 0.6931472
        %v1298 = vlog2.pop %v1274
        %v1299 = vmul.f32 %v1298, 0.6931472
        %v1300 = vlog2.pop %v1275
        %v1301 = vmul.f32 %v1300, 0.6931472
        %v1302 = vlog2.pop %v1276
        %v1303 = vmul.f32 %v1302, 0.6931472
        %v1304 = vlog2.pop %v1277
        %v1305 = vmul.f32 %v1304, 0.6931472
        %v1306 = vlog2.pop %v1278
        %v1307 = vmul.f32 %v1306, 0.6931472
        %v1308 = vlog2.pop %v1279
        %v1309 = vmul.f32 %v1308, 0.6931472
        %v1310 = vlog2.pop %v1280
        %v1311 = vmul.f32 %v1310, 0.6931472
        %v1312 = vlog2.pop %v1281
        %v1313 = vmul.f32 %v1312, 0.6931472
        %vm1314 = vcmp.gt.f32.partialorder %v1107, 20.0
        %vm1315 = vcmp.gt.f32.partialorder %v1109, 20.0
        %vm1316 = vcmp.gt.f32.partialorder %v1196, 20.0
        %vm1317 = vcmp.gt.f32.partialorder %v1198, 20.0
        %vm1318 = vcmp.gt.f32.partialorder %v1113, 20.0
        %vm1319 = vcmp.gt.f32.partialorder %v1115, 20.0
        %vm1320 = vcmp.gt.f32.partialorder %v1202, 20.0
        %vm1321 = vcmp.gt.f32.partialorder %v1204, 20.0
        %vm1322 = vcmp.gt.f32.partialorder %v1119, 20.0
        %vm1323 = vcmp.gt.f32.partialorder %v1121, 20.0
        %vm1324 = vcmp.gt.f32.partialorder %v1208, 20.0
        %vm1325 = vcmp.gt.f32.partialorder %v1210, 20.0
        %vm1326 = vcmp.gt.f32.partialorder %v1125, 20.0
        %vm1327 = vcmp.gt.f32.partialorder %v1127, 20.0
        %vm1328 = vcmp.gt.f32.partialorder %v1214, 20.0
        %vm1329 = vcmp.gt.f32.partialorder %v1216, 20.0
        %v1330 = vsel %vm1314, %v1107, %v1283
        %v1331 = vsel %vm1315, %v1109, %v1285
        %v1332 = vsel %vm1316, %v1196, %v1287
        %v1333 = vsel %vm1317, %v1198, %v1289
        %v1334 = vsel %vm1318, %v1113, %v1291
        %v1335 = vsel %vm1319, %v1115, %v1293
        %v1336 = vsel %vm1320, %v1202, %v1295
        %v1337 = vsel %vm1321, %v1204, %v1297
        %v1338 = vsel %vm1322, %v1119, %v1299
        %v1339 = vsel %vm1323, %v1121, %v1301
        %v1340 = vsel %vm1324, %v1208, %v1303
        %v1341 = vsel %vm1325, %v1210, %v1305
        %v1342 = vsel %vm1326, %v1125, %v1307
        %v1343 = vsel %vm1327, %v1127, %v1309
        %v1344 = vsel %vm1328, %v1214, %v1311
        %v1345 = vsel %vm1329, %v1216, %v1313
        %s1346 = scalar_lea.vmem [#allocation2], 64
        %v1347 = vld [vmem:[%s1346] sm:$0xff]
        %v1348 = vld [vmem:[%s1346 + $0x8] sm:$0xff]
        %v1349 = vld [vmem:[%s1346 + $0x10] sm:$0xff]
        %v1350 = vld [vmem:[%s1346 + $0x18] sm:$0xff]
        %s1351 = scalar_lea.vmem [#allocation4], 64
        %v1352 = vld [vmem:[%s1351] sm:$0xff]
        %v1353 = vld [vmem:[%s1351 + $0x8] sm:$0xff]
        %v1354 = vld [vmem:[%s1351 + $0x10] sm:$0xff]
        %v1355 = vld [vmem:[%s1351 + $0x18] sm:$0xff]
        %1357 = vset.pattern.permute.xlu0 0
        %1358 = vperm.xlu0 %1357, %v1352
        %v1359 = vpop.permute.xlu0 %1358
        %1362 = vset.pattern.permute.xlu0 0
        %1363 = vperm.xlu0 %1362, %v1353
        %v1364 = vpop.permute.xlu0 %1363
        %1367 = vset.pattern.permute.xlu0 0
        %1368 = vperm.xlu0 %1367, %v1354
        %v1369 = vpop.permute.xlu0 %1368
        %1372 = vset.pattern.permute.xlu0 0
        %1373 = vperm.xlu0 %1372, %v1355
        %v1374 = vpop.permute.xlu0 %1373
        %v1377 = vsel %vm679, %v1347, 0
        %v1380 = vsel %vm679, %v1348, 0
        %v1383 = vsel %vm679, %v1349, 0
        %v1386 = vsel %vm679, %v1350, 0
        %1388 = vmatprep.subr.mxu0 0.0
        %1389 = vmatpush1.msra.mxu0 0.0
        %1390 = vmatprep.subr.mxu0 0.0
        %1391 = vmatpush1.msra.mxu0 0.0
        %1392 = vmatprep.subr.mxu0 0.0
        %1393 = vmatpush1.msra.mxu0 0.0
        %1394 = vmatprep.subr.mxu0 0.0
        %1395 = vmatpush1.msra.mxu0 0.0
        %1396 = vmatprep.subr.mxu0 0.0
        %1397 = vmatpush1.msra.mxu0 0.0
        %1398 = vmatprep.subr.mxu0 0.0
        %1399 = vmatpush1.msra.mxu0 0.0
        %1400 = vmatprep.subr.mxu0 0.0
        %1401 = vmatpush1.msra.mxu0 0.0
        %1402 = vmatprep.subr.mxu0 0.0
        %1403 = vmatpush1.msra.mxu0 0.0
        %1404 = vmatprep.subr.mxu0 0.0
        %1405 = vmatpush1.msra.mxu0 0.0
        %1406 = vmatprep.subr.mxu0 0.0
        %1407 = vmatpush1.msra.mxu0 0.0
        %1408 = vmatprep.subr.mxu0 0.0
        %1409 = vmatpush1.msra.mxu0 0.0
        %1410 = vmatprep.subr.mxu0 0.0
        %1411 = vmatpush1.msra.mxu0 0.0
        %1412 = vmatprep.subr.mxu0 %v1343
        %1413 = vmatpush1.msra.mxu0 %v1342
        %1414 = vmatprep.subr.mxu0 %v1339
        %1415 = vmatpush1.msra.mxu0 %v1338
        %1416 = vmatprep.subr.mxu0 %v1335
        %1417 = vmatpush1.msra.mxu0 %v1334
        %1418 = vmatprep.subr.mxu0 %v1331
        %1419 = vmatpush1.msra.mxu0 %v1330
        %1420 = vmatprep.subr.mxu0 0.0
        %1421 = vmatpush2.msra.mxu0 0.0
        %1422 = vmatprep.subr.mxu0 0.0
        %1423 = vmatpush2.msra.mxu0 0.0
        %1424 = vmatprep.subr.mxu0 0.0
        %1425 = vmatpush2.msra.mxu0 0.0
        %1426 = vmatprep.subr.mxu0 0.0
        %1427 = vmatpush2.msra.mxu0 0.0
        %1428 = vmatprep.subr.mxu0 0.0
        %1429 = vmatpush2.msra.mxu0 0.0
        %1430 = vmatprep.subr.mxu0 0.0
        %1431 = vmatpush2.msra.mxu0 0.0
        %1432 = vmatprep.subr.mxu0 0.0
        %1433 = vmatpush2.msra.mxu0 0.0
        %1434 = vmatprep.subr.mxu0 0.0
        %1435 = vmatpush2.msra.mxu0 0.0
        %1436 = vmatprep.subr.mxu0 0.0
        %1437 = vmatpush2.msra.mxu0 0.0
        %1438 = vmatprep.subr.mxu0 0.0
        %1439 = vmatpush2.msra.mxu0 0.0
        %1440 = vmatprep.subr.mxu0 0.0
        %1441 = vmatpush2.msra.mxu0 0.0
        %1442 = vmatprep.subr.mxu0 0.0
        %1443 = vmatpush2.msra.mxu0 0.0
        %1444 = vmatprep.subr.mxu0 0.0
        %1445 = vmatpush2.msra.mxu0 0.0
        %1446 = vmatprep.subr.mxu0 0.0
        %1447 = vmatpush2.msra.mxu0 0.0
        %1448 = vmatprep.subr.mxu0 0.0
        %1449 = vmatpush2.msra.mxu0 0.0
        %1450 = vmatprep.subr.mxu0 0.0
        %1451 = vmatpush2.msra.mxu0 0.0
        %1452 = vmatprep.mubr.f32.mxu0 0.0
        %1453 = vmatmul.mubr.f32.gmra.mxu0 %v1377
        %v1454 = vpop.f32.mrf.mxu0
        %v1455 = vadd.f32 %v1359, %v1454
        %v1456 = vpop.f32.mrf.mxu0
        %v1457 = vadd.f32 %v1359, %v1456
        %1458 = vmatprep.mubr.f32.mxu0 0.0
        %1459 = vmatmul.mubr.f32.gmra.mxu0 %v1380
        %v1460 = vpop.f32.mrf.mxu0
        %v1461 = vadd.f32 %v1364, %v1460
        %v1462 = vpop.f32.mrf.mxu0
        %v1463 = vadd.f32 %v1364, %v1462
        %1464 = vmatprep.mubr.f32.mxu0 0.0
        %1465 = vmatmul.mubr.f32.gmra.mxu0 %v1383
        %v1466 = vpop.f32.mrf.mxu0
        %v1467 = vadd.f32 %v1369, %v1466
        %v1468 = vpop.f32.mrf.mxu0
        %v1469 = vadd.f32 %v1369, %v1468
        %1470 = vmatprep.mubr.f32.mxu0 0.0
        %1471 = vmatmul.mubr.f32.gmra.mxu0 %v1386
        %v1472 = vpop.f32.mrf.mxu0
        %v1473 = vadd.f32 %v1374, %v1472
        %v1474 = vpop.f32.mrf.mxu0
        %v1475 = vadd.f32 %v1374, %v1474
        %1476 = vdwg.mxu0
        %1477 = vmatprep.subr.mxu0 0.0
        %1478 = vmatpush1.msra.mxu0 0.0
        %1479 = vmatprep.subr.mxu0 0.0
        %1480 = vmatpush1.msra.mxu0 0.0
        %1481 = vmatprep.subr.mxu0 0.0
        %1482 = vmatpush1.msra.mxu0 0.0
        %1483 = vmatprep.subr.mxu0 0.0
        %1484 = vmatpush1.msra.mxu0 0.0
        %1485 = vmatprep.subr.mxu0 0.0
        %1486 = vmatpush1.msra.mxu0 0.0
        %1487 = vmatprep.subr.mxu0 0.0
        %1488 = vmatpush1.msra.mxu0 0.0
        %1489 = vmatprep.subr.mxu0 0.0
        %1490 = vmatpush1.msra.mxu0 0.0
        %1491 = vmatprep.subr.mxu0 0.0
        %1492 = vmatpush1.msra.mxu0 0.0
        %1493 = vmatprep.subr.mxu0 0.0
        %1494 = vmatpush1.msra.mxu0 0.0
        %1495 = vmatprep.subr.mxu0 0.0
        %1496 = vmatpush1.msra.mxu0 0.0
        %1497 = vmatprep.subr.mxu0 0.0
        %1498 = vmatpush1.msra.mxu0 0.0
        %1499 = vmatprep.subr.mxu0 0.0
        %1500 = vmatpush1.msra.mxu0 0.0
        %1501 = vmatprep.subr.mxu0 %v1345
        %1502 = vmatpush1.msra.mxu0 %v1344
        %1503 = vmatprep.subr.mxu0 %v1341
        %1504 = vmatpush1.msra.mxu0 %v1340
        %1505 = vmatprep.subr.mxu0 %v1337
        %1506 = vmatpush1.msra.mxu0 %v1336
        %1507 = vmatprep.subr.mxu0 %v1333
        %1508 = vmatpush1.msra.mxu0 %v1332
        %1509 = vmatprep.subr.mxu0 0.0
        %1510 = vmatpush2.msra.mxu0 0.0
        %1511 = vmatprep.subr.mxu0 0.0
        %1512 = vmatpush2.msra.mxu0 0.0
        %1513 = vmatprep.subr.mxu0 0.0
        %1514 = vmatpush2.msra.mxu0 0.0
        %1515 = vmatprep.subr.mxu0 0.0
        %1516 = vmatpush2.msra.mxu0 0.0
        %1517 = vmatprep.subr.mxu0 0.0
        %1518 = vmatpush2.msra.mxu0 0.0
        %1519 = vmatprep.subr.mxu0 0.0
        %1520 = vmatpush2.msra.mxu0 0.0
        %1521 = vmatprep.subr.mxu0 0.0
        %1522 = vmatpush2.msra.mxu0 0.0
        %1523 = vmatprep.subr.mxu0 0.0
        %1524 = vmatpush2.msra.mxu0 0.0
        %1525 = vmatprep.subr.mxu0 0.0
        %1526 = vmatpush2.msra.mxu0 0.0
        %1527 = vmatprep.subr.mxu0 0.0
        %1528 = vmatpush2.msra.mxu0 0.0
        %1529 = vmatprep.subr.mxu0 0.0
        %1530 = vmatpush2.msra.mxu0 0.0
        %1531 = vmatprep.subr.mxu0 0.0
        %1532 = vmatpush2.msra.mxu0 0.0
        %1533 = vmatprep.subr.mxu0 0.0
        %1534 = vmatpush2.msra.mxu0 0.0
        %1535 = vmatprep.subr.mxu0 0.0
        %1536 = vmatpush2.msra.mxu0 0.0
        %1537 = vmatprep.subr.mxu0 0.0
        %1538 = vmatpush2.msra.mxu0 0.0
        %1539 = vmatprep.subr.mxu0 0.0
        %1540 = vmatpush2.msra.mxu0 0.0
        %1541 = vmatprep.mubr.f32.mxu0 0.0
        %1542 = vmatmul.mubr.f32.gmra.mxu0 %v1377
        %v1543 = vpop.f32.mrf.mxu0
        %v1544 = vadd.f32 %v1359, %v1543
        %v1545 = vpop.f32.mrf.mxu0
        %v1546 = vadd.f32 %v1359, %v1545
        %1547 = vmatprep.mubr.f32.mxu0 0.0
        %1548 = vmatmul.mubr.f32.gmra.mxu0 %v1380
        %v1549 = vpop.f32.mrf.mxu0
        %v1550 = vadd.f32 %v1364, %v1549
        %v1551 = vpop.f32.mrf.mxu0
        %v1552 = vadd.f32 %v1364, %v1551
        %1553 = vmatprep.mubr.f32.mxu0 0.0
        %1554 = vmatmul.mubr.f32.gmra.mxu0 %v1383
        %v1555 = vpop.f32.mrf.mxu0
        %v1556 = vadd.f32 %v1369, %v1555
        %v1557 = vpop.f32.mrf.mxu0
        %v1558 = vadd.f32 %v1369, %v1557
        %1559 = vmatprep.mubr.f32.mxu0 0.0
        %1560 = vmatmul.mubr.f32.gmra.mxu0 %v1386
        %v1561 = vpop.f32.mrf.mxu0
        %v1562 = vadd.f32 %v1374, %v1561
        %v1563 = vpop.f32.mrf.mxu0
        %v1564 = vadd.f32 %v1374, %v1563
        %1565 = vdwg.mxu0
        %v1566 = vmin.f32 %v1455, 20.0
        %v1567 = vmin.f32 %v1457, 20.0
        %v1568 = vmin.f32 %v1544, 20.0
        %v1569 = vmin.f32 %v1546, 20.0
        %v1570 = vmin.f32 %v1461, 20.0
        %v1571 = vmin.f32 %v1463, 20.0
        %v1572 = vmin.f32 %v1550, 20.0
        %v1573 = vmin.f32 %v1552, 20.0
        %v1574 = vmin.f32 %v1467, 20.0
        %v1575 = vmin.f32 %v1469, 20.0
        %v1576 = vmin.f32 %v1556, 20.0
        %v1577 = vmin.f32 %v1558, 20.0
        %v1578 = vmin.f32 %v1473, 20.0
        %v1579 = vmin.f32 %v1475, 20.0
        %v1580 = vmin.f32 %v1562, 20.0
        %v1581 = vmin.f32 %v1564, 20.0
        %v1582 = vmul.f32 %v1566, 1.442695
        %v1583 = vpow.pop %v1582
        %v1584 = vmul.f32 %v1567, 1.442695
        %v1585 = vpow.pop %v1584
        %v1586 = vmul.f32 %v1568, 1.442695
        %v1587 = vpow.pop %v1586
        %v1588 = vmul.f32 %v1569, 1.442695
        %v1589 = vpow.pop %v1588
        %v1590 = vmul.f32 %v1570, 1.442695
        %v1591 = vpow.pop %v1590
        %v1592 = vmul.f32 %v1571, 1.442695
        %v1593 = vpow.pop %v1592
        %v1594 = vmul.f32 %v1572, 1.442695
        %v1595 = vpow.pop %v1594
        %v1596 = vmul.f32 %v1573, 1.442695
        %v1597 = vpow.pop %v1596
        %v1598 = vmul.f32 %v1574, 1.442695
        %v1599 = vpow.pop %v1598
        %v1600 = vmul.f32 %v1575, 1.442695
        %v1601 = vpow.pop %v1600
        %v1602 = vmul.f32 %v1576, 1.442695
        %v1603 = vpow.pop %v1602
        %v1604 = vmul.f32 %v1577, 1.442695
        %v1605 = vpow.pop %v1604
        %v1606 = vmul.f32 %v1578, 1.442695
        %v1607 = vpow.pop %v1606
        %v1608 = vmul.f32 %v1579, 1.442695
        %v1609 = vpow.pop %v1608
        %v1610 = vmul.f32 %v1580, 1.442695
        %v1611 = vpow.pop %v1610
        %v1612 = vmul.f32 %v1581, 1.442695
        %v1613 = vpow.pop %v1612
        %v1614 = vadd.f32 %v1583, 1.0
        %v1615 = vadd.f32 %v1585, 1.0
        %v1616 = vadd.f32 %v1587, 1.0
        %v1617 = vadd.f32 %v1589, 1.0
        %v1618 = vadd.f32 %v1591, 1.0
        %v1619 = vadd.f32 %v1593, 1.0
        %v1620 = vadd.f32 %v1595, 1.0
        %v1621 = vadd.f32 %v1597, 1.0
        %v1622 = vadd.f32 %v1599, 1.0
        %v1623 = vadd.f32 %v1601, 1.0
        %v1624 = vadd.f32 %v1603, 1.0
        %v1625 = vadd.f32 %v1605, 1.0
        %v1626 = vadd.f32 %v1607, 1.0
        %v1627 = vadd.f32 %v1609, 1.0
        %v1628 = vadd.f32 %v1611, 1.0
        %v1629 = vadd.f32 %v1613, 1.0
        %v1630 = vlog2.pop %v1614
        %v1631 = vmul.f32 %v1630, 0.6931472
        %v1632 = vlog2.pop %v1615
        %v1633 = vmul.f32 %v1632, 0.6931472
        %v1634 = vlog2.pop %v1616
        %v1635 = vmul.f32 %v1634, 0.6931472
        %v1636 = vlog2.pop %v1617
        %v1637 = vmul.f32 %v1636, 0.6931472
        %v1638 = vlog2.pop %v1618
        %v1639 = vmul.f32 %v1638, 0.6931472
        %v1640 = vlog2.pop %v1619
        %v1641 = vmul.f32 %v1640, 0.6931472
        %v1642 = vlog2.pop %v1620
        %v1643 = vmul.f32 %v1642, 0.6931472
        %v1644 = vlog2.pop %v1621
        %v1645 = vmul.f32 %v1644, 0.6931472
        %v1646 = vlog2.pop %v1622
        %v1647 = vmul.f32 %v1646, 0.6931472
        %v1648 = vlog2.pop %v1623
        %v1649 = vmul.f32 %v1648, 0.6931472
        %v1650 = vlog2.pop %v1624
        %v1651 = vmul.f32 %v1650, 0.6931472
        %v1652 = vlog2.pop %v1625
        %v1653 = vmul.f32 %v1652, 0.6931472
        %v1654 = vlog2.pop %v1626
        %v1655 = vmul.f32 %v1654, 0.6931472
        %v1656 = vlog2.pop %v1627
        %v1657 = vmul.f32 %v1656, 0.6931472
        %v1658 = vlog2.pop %v1628
        %v1659 = vmul.f32 %v1658, 0.6931472
        %v1660 = vlog2.pop %v1629
        %v1661 = vmul.f32 %v1660, 0.6931472
        %vm1662 = vcmp.gt.f32.partialorder %v1455, 20.0
        %vm1663 = vcmp.gt.f32.partialorder %v1457, 20.0
        %vm1664 = vcmp.gt.f32.partialorder %v1544, 20.0
        %vm1665 = vcmp.gt.f32.partialorder %v1546, 20.0
        %vm1666 = vcmp.gt.f32.partialorder %v1461, 20.0
        %vm1667 = vcmp.gt.f32.partialorder %v1463, 20.0
        %vm1668 = vcmp.gt.f32.partialorder %v1550, 20.0
        %vm1669 = vcmp.gt.f32.partialorder %v1552, 20.0
        %vm1670 = vcmp.gt.f32.partialorder %v1467, 20.0
        %vm1671 = vcmp.gt.f32.partialorder %v1469, 20.0
        %vm1672 = vcmp.gt.f32.partialorder %v1556, 20.0
        %vm1673 = vcmp.gt.f32.partialorder %v1558, 20.0
        %vm1674 = vcmp.gt.f32.partialorder %v1473, 20.0
        %vm1675 = vcmp.gt.f32.partialorder %v1475, 20.0
        %vm1676 = vcmp.gt.f32.partialorder %v1562, 20.0
        %vm1677 = vcmp.gt.f32.partialorder %v1564, 20.0
        %v1678 = vsel %vm1662, %v1455, %v1631
        %v1679 = vsel %vm1663, %v1457, %v1633
        %v1680 = vsel %vm1664, %v1544, %v1635
        %v1681 = vsel %vm1665, %v1546, %v1637
        %v1682 = vsel %vm1666, %v1461, %v1639
        %v1683 = vsel %vm1667, %v1463, %v1641
        %v1684 = vsel %vm1668, %v1550, %v1643
        %v1685 = vsel %vm1669, %v1552, %v1645
        %v1686 = vsel %vm1670, %v1467, %v1647
        %v1687 = vsel %vm1671, %v1469, %v1649
        %v1688 = vsel %vm1672, %v1556, %v1651
        %v1689 = vsel %vm1673, %v1558, %v1653
        %v1690 = vsel %vm1674, %v1473, %v1655
        %v1691 = vsel %vm1675, %v1475, %v1657
        %v1692 = vsel %vm1676, %v1562, %v1659
        %v1693 = vsel %vm1677, %v1564, %v1661
        %s1694 = scalar_lea.vmem [#allocation2], 96
        %v1695 = vld [vmem:[%s1694] sm:$0xff]
        %v1696 = vld [vmem:[%s1694 + $0x8] sm:$0xff]
        %v1697 = vld [vmem:[%s1694 + $0x10] sm:$0xff]
        %v1698 = vld [vmem:[%s1694 + $0x18] sm:$0xff]
        %s1699 = scalar_lea.vmem [#allocation4], 96
        %v1700 = vld [vmem:[%s1699] sm:$0xff]
        %v1701 = vld [vmem:[%s1699 + $0x8] sm:$0xff]
        %v1702 = vld [vmem:[%s1699 + $0x10] sm:$0xff]
        %v1703 = vld [vmem:[%s1699 + $0x18] sm:$0xff]
        %1705 = vset.pattern.permute.xlu0 0
        %1706 = vperm.xlu0 %1705, %v1700
        %v1707 = vpop.permute.xlu0 %1706
        %1710 = vset.pattern.permute.xlu0 0
        %1711 = vperm.xlu0 %1710, %v1701
        %v1712 = vpop.permute.xlu0 %1711
        %1715 = vset.pattern.permute.xlu0 0
        %1716 = vperm.xlu0 %1715, %v1702
        %v1717 = vpop.permute.xlu0 %1716
        %1720 = vset.pattern.permute.xlu0 0
        %1721 = vperm.xlu0 %1720, %v1703
        %v1722 = vpop.permute.xlu0 %1721
        %v1725 = vsel %vm679, %v1695, 0
        %v1728 = vsel %vm679, %v1696, 0
        %v1731 = vsel %vm679, %v1697, 0
        %v1734 = vsel %vm679, %v1698, 0
        %1736 = vmatprep.subr.mxu0 0.0
        %1737 = vmatpush1.msra.mxu0 0.0
        %1738 = vmatprep.subr.mxu0 0.0
        %1739 = vmatpush1.msra.mxu0 0.0
        %1740 = vmatprep.subr.mxu0 0.0
        %1741 = vmatpush1.msra.mxu0 0.0
        %1742 = vmatprep.subr.mxu0 0.0
        %1743 = vmatpush1.msra.mxu0 0.0
        %1744 = vmatprep.subr.mxu0 0.0
        %1745 = vmatpush1.msra.mxu0 0.0
        %1746 = vmatprep.subr.mxu0 0.0
        %1747 = vmatpush1.msra.mxu0 0.0
        %1748 = vmatprep.subr.mxu0 0.0
        %1749 = vmatpush1.msra.mxu0 0.0
        %1750 = vmatprep.subr.mxu0 0.0
        %1751 = vmatpush1.msra.mxu0 0.0
        %1752 = vmatprep.subr.mxu0 0.0
        %1753 = vmatpush1.msra.mxu0 0.0
        %1754 = vmatprep.subr.mxu0 0.0
        %1755 = vmatpush1.msra.mxu0 0.0
        %1756 = vmatprep.subr.mxu0 0.0
        %1757 = vmatpush1.msra.mxu0 0.0
        %1758 = vmatprep.subr.mxu0 0.0
        %1759 = vmatpush1.msra.mxu0 0.0
        %1760 = vmatprep.subr.mxu0 %v1691
        %1761 = vmatpush1.msra.mxu0 %v1690
        %1762 = vmatprep.subr.mxu0 %v1687
        %1763 = vmatpush1.msra.mxu0 %v1686
        %1764 = vmatprep.subr.mxu0 %v1683
        %1765 = vmatpush1.msra.mxu0 %v1682
        %1766 = vmatprep.subr.mxu0 %v1679
        %1767 = vmatpush1.msra.mxu0 %v1678
        %1768 = vmatprep.subr.mxu0 0.0
        %1769 = vmatpush2.msra.mxu0 0.0
        %1770 = vmatprep.subr.mxu0 0.0
        %1771 = vmatpush2.msra.mxu0 0.0
        %1772 = vmatprep.subr.mxu0 0.0
        %1773 = vmatpush2.msra.mxu0 0.0
        %1774 = vmatprep.subr.mxu0 0.0
        %1775 = vmatpush2.msra.mxu0 0.0
        %1776 = vmatprep.subr.mxu0 0.0
        %1777 = vmatpush2.msra.mxu0 0.0
        %1778 = vmatprep.subr.mxu0 0.0
        %1779 = vmatpush2.msra.mxu0 0.0
        %1780 = vmatprep.subr.mxu0 0.0
        %1781 = vmatpush2.msra.mxu0 0.0
        %1782 = vmatprep.subr.mxu0 0.0
        %1783 = vmatpush2.msra.mxu0 0.0
        %1784 = vmatprep.subr.mxu0 0.0
        %1785 = vmatpush2.msra.mxu0 0.0
        %1786 = vmatprep.subr.mxu0 0.0
        %1787 = vmatpush2.msra.mxu0 0.0
        %1788 = vmatprep.subr.mxu0 0.0
        %1789 = vmatpush2.msra.mxu0 0.0
        %1790 = vmatprep.subr.mxu0 0.0
        %1791 = vmatpush2.msra.mxu0 0.0
        %1792 = vmatprep.subr.mxu0 0.0
        %1793 = vmatpush2.msra.mxu0 0.0
        %1794 = vmatprep.subr.mxu0 0.0
        %1795 = vmatpush2.msra.mxu0 0.0
        %1796 = vmatprep.subr.mxu0 0.0
        %1797 = vmatpush2.msra.mxu0 0.0
        %1798 = vmatprep.subr.mxu0 0.0
        %1799 = vmatpush2.msra.mxu0 0.0
        %1800 = vmatprep.mubr.f32.mxu0 0.0
        %1801 = vmatmul.mubr.f32.gmra.mxu0 %v1725
        %v1802 = vpop.f32.mrf.mxu0
        %v1803 = vadd.f32 %v1707, %v1802
        %v1804 = vpop.f32.mrf.mxu0
        %v1805 = vadd.f32 %v1707, %v1804
        %1806 = vmatprep.mubr.f32.mxu0 0.0
        %1807 = vmatmul.mubr.f32.gmra.mxu0 %v1728
        %v1808 = vpop.f32.mrf.mxu0
        %v1809 = vadd.f32 %v1712, %v1808
        %v1810 = vpop.f32.mrf.mxu0
        %v1811 = vadd.f32 %v1712, %v1810
        %1812 = vmatprep.mubr.f32.mxu0 0.0
        %1813 = vmatmul.mubr.f32.gmra.mxu0 %v1731
        %v1814 = vpop.f32.mrf.mxu0
        %v1815 = vadd.f32 %v1717, %v1814
        %v1816 = vpop.f32.mrf.mxu0
        %v1817 = vadd.f32 %v1717, %v1816
        %1818 = vmatprep.mubr.f32.mxu0 0.0
        %1819 = vmatmul.mubr.f32.gmra.mxu0 %v1734
        %v1820 = vpop.f32.mrf.mxu0
        %v1821 = vadd.f32 %v1722, %v1820
        %v1822 = vpop.f32.mrf.mxu0
        %v1823 = vadd.f32 %v1722, %v1822
        %1824 = vdwg.mxu0
        %1825 = vmatprep.subr.mxu0 0.0
        %1826 = vmatpush1.msra.mxu0 0.0
        %1827 = vmatprep.subr.mxu0 0.0
        %1828 = vmatpush1.msra.mxu0 0.0
        %1829 = vmatprep.subr.mxu0 0.0
        %1830 = vmatpush1.msra.mxu0 0.0
        %1831 = vmatprep.subr.mxu0 0.0
        %1832 = vmatpush1.msra.mxu0 0.0
        %1833 = vmatprep.subr.mxu0 0.0
        %1834 = vmatpush1.msra.mxu0 0.0
        %1835 = vmatprep.subr.mxu0 0.0
        %1836 = vmatpush1.msra.mxu0 0.0
        %1837 = vmatprep.subr.mxu0 0.0
        %1838 = vmatpush1.msra.mxu0 0.0
        %1839 = vmatprep.subr.mxu0 0.0
        %1840 = vmatpush1.msra.mxu0 0.0
        %1841 = vmatprep.subr.mxu0 0.0
        %1842 = vmatpush1.msra.mxu0 0.0
        %1843 = vmatprep.subr.mxu0 0.0
        %1844 = vmatpush1.msra.mxu0 0.0
        %1845 = vmatprep.subr.mxu0 0.0
        %1846 = vmatpush1.msra.mxu0 0.0
        %1847 = vmatprep.subr.mxu0 0.0
        %1848 = vmatpush1.msra.mxu0 0.0
        %1849 = vmatprep.subr.mxu0 %v1693
        %1850 = vmatpush1.msra.mxu0 %v1692
        %1851 = vmatprep.subr.mxu0 %v1689
        %1852 = vmatpush1.msra.mxu0 %v1688
        %1853 = vmatprep.subr.mxu0 %v1685
        %1854 = vmatpush1.msra.mxu0 %v1684
        %1855 = vmatprep.subr.mxu0 %v1681
        %1856 = vmatpush1.msra.mxu0 %v1680
        %1857 = vmatprep.subr.mxu0 0.0
        %1858 = vmatpush2.msra.mxu0 0.0
        %1859 = vmatprep.subr.mxu0 0.0
        %1860 = vmatpush2.msra.mxu0 0.0
        %1861 = vmatprep.subr.mxu0 0.0
        %1862 = vmatpush2.msra.mxu0 0.0
        %1863 = vmatprep.subr.mxu0 0.0
        %1864 = vmatpush2.msra.mxu0 0.0
        %1865 = vmatprep.subr.mxu0 0.0
        %1866 = vmatpush2.msra.mxu0 0.0
        %1867 = vmatprep.subr.mxu0 0.0
        %1868 = vmatpush2.msra.mxu0 0.0
        %1869 = vmatprep.subr.mxu0 0.0
        %1870 = vmatpush2.msra.mxu0 0.0
        %1871 = vmatprep.subr.mxu0 0.0
        %1872 = vmatpush2.msra.mxu0 0.0
        %1873 = vmatprep.subr.mxu0 0.0
        %1874 = vmatpush2.msra.mxu0 0.0
        %1875 = vmatprep.subr.mxu0 0.0
        %1876 = vmatpush2.msra.mxu0 0.0
        %1877 = vmatprep.subr.mxu0 0.0
        %1878 = vmatpush2.msra.mxu0 0.0
        %1879 = vmatprep.subr.mxu0 0.0
        %1880 = vmatpush2.msra.mxu0 0.0
        %1881 = vmatprep.subr.mxu0 0.0
        %1882 = vmatpush2.msra.mxu0 0.0
        %1883 = vmatprep.subr.mxu0 0.0
        %1884 = vmatpush2.msra.mxu0 0.0
        %1885 = vmatprep.subr.mxu0 0.0
        %1886 = vmatpush2.msra.mxu0 0.0
        %1887 = vmatprep.subr.mxu0 0.0
        %1888 = vmatpush2.msra.mxu0 0.0
        %1889 = vmatprep.mubr.f32.mxu0 0.0
        %1890 = vmatmul.mubr.f32.gmra.mxu0 %v1725
        %v1891 = vpop.f32.mrf.mxu0
        %v1892 = vadd.f32 %v1707, %v1891
        %v1893 = vpop.f32.mrf.mxu0
        %v1894 = vadd.f32 %v1707, %v1893
        %1895 = vmatprep.mubr.f32.mxu0 0.0
        %1896 = vmatmul.mubr.f32.gmra.mxu0 %v1728
        %v1897 = vpop.f32.mrf.mxu0
        %v1898 = vadd.f32 %v1712, %v1897
        %v1899 = vpop.f32.mrf.mxu0
        %v1900 = vadd.f32 %v1712, %v1899
        %1901 = vmatprep.mubr.f32.mxu0 0.0
        %1902 = vmatmul.mubr.f32.gmra.mxu0 %v1731
        %v1903 = vpop.f32.mrf.mxu0
        %v1904 = vadd.f32 %v1717, %v1903
        %v1905 = vpop.f32.mrf.mxu0
        %v1906 = vadd.f32 %v1717, %v1905
        %1907 = vmatprep.mubr.f32.mxu0 0.0
        %1908 = vmatmul.mubr.f32.gmra.mxu0 %v1734
        %v1909 = vpop.f32.mrf.mxu0
        %v1910 = vadd.f32 %v1722, %v1909
        %v1911 = vpop.f32.mrf.mxu0
        %v1912 = vadd.f32 %v1722, %v1911
        %1913 = vdwg.mxu0
        %v1914 = vmin.f32 %v1803, 20.0
        %v1915 = vmin.f32 %v1805, 20.0
        %v1916 = vmin.f32 %v1892, 20.0
        %v1917 = vmin.f32 %v1894, 20.0
        %v1918 = vmin.f32 %v1809, 20.0
        %v1919 = vmin.f32 %v1811, 20.0
        %v1920 = vmin.f32 %v1898, 20.0
        %v1921 = vmin.f32 %v1900, 20.0
        %v1922 = vmin.f32 %v1815, 20.0
        %v1923 = vmin.f32 %v1817, 20.0
        %v1924 = vmin.f32 %v1904, 20.0
        %v1925 = vmin.f32 %v1906, 20.0
        %v1926 = vmin.f32 %v1821, 20.0
        %v1927 = vmin.f32 %v1823, 20.0
        %v1928 = vmin.f32 %v1910, 20.0
        %v1929 = vmin.f32 %v1912, 20.0
        %v1930 = vmul.f32 %v1914, 1.442695
        %v1931 = vpow.pop %v1930
        %v1932 = vmul.f32 %v1915, 1.442695
        %v1933 = vpow.pop %v1932
        %v1934 = vmul.f32 %v1916, 1.442695
        %v1935 = vpow.pop %v1934
        %v1936 = vmul.f32 %v1917, 1.442695
        %v1937 = vpow.pop %v1936
        %v1938 = vmul.f32 %v1918, 1.442695
        %v1939 = vpow.pop %v1938
        %v1940 = vmul.f32 %v1919, 1.442695
        %v1941 = vpow.pop %v1940
        %v1942 = vmul.f32 %v1920, 1.442695
        %v1943 = vpow.pop %v1942
        %v1944 = vmul.f32 %v1921, 1.442695
        %v1945 = vpow.pop %v1944
        %v1946 = vmul.f32 %v1922, 1.442695
        %v1947 = vpow.pop %v1946
        %v1948 = vmul.f32 %v1923, 1.442695
        %v1949 = vpow.pop %v1948
        %v1950 = vmul.f32 %v1924, 1.442695
        %v1951 = vpow.pop %v1950
        %v1952 = vmul.f32 %v1925, 1.442695
        %v1953 = vpow.pop %v1952
        %v1954 = vmul.f32 %v1926, 1.442695
        %v1955 = vpow.pop %v1954
        %v1956 = vmul.f32 %v1927, 1.442695
        %v1957 = vpow.pop %v1956
        %v1958 = vmul.f32 %v1928, 1.442695
        %v1959 = vpow.pop %v1958
        %v1960 = vmul.f32 %v1929, 1.442695
        %v1961 = vpow.pop %v1960
        %v1962 = vadd.f32 %v1931, 1.0
        %v1963 = vadd.f32 %v1933, 1.0
        %v1964 = vadd.f32 %v1935, 1.0
        %v1965 = vadd.f32 %v1937, 1.0
        %v1966 = vadd.f32 %v1939, 1.0
        %v1967 = vadd.f32 %v1941, 1.0
        %v1968 = vadd.f32 %v1943, 1.0
        %v1969 = vadd.f32 %v1945, 1.0
        %v1970 = vadd.f32 %v1947, 1.0
        %v1971 = vadd.f32 %v1949, 1.0
        %v1972 = vadd.f32 %v1951, 1.0
        %v1973 = vadd.f32 %v1953, 1.0
        %v1974 = vadd.f32 %v1955, 1.0
        %v1975 = vadd.f32 %v1957, 1.0
        %v1976 = vadd.f32 %v1959, 1.0
        %v1977 = vadd.f32 %v1961, 1.0
        %v1978 = vlog2.pop %v1962
        %v1979 = vmul.f32 %v1978, 0.6931472
        %v1980 = vlog2.pop %v1963
        %v1981 = vmul.f32 %v1980, 0.6931472
        %v1982 = vlog2.pop %v1964
        %v1983 = vmul.f32 %v1982, 0.6931472
        %v1984 = vlog2.pop %v1965
        %v1985 = vmul.f32 %v1984, 0.6931472
        %v1986 = vlog2.pop %v1966
        %v1987 = vmul.f32 %v1986, 0.6931472
        %v1988 = vlog2.pop %v1967
        %v1989 = vmul.f32 %v1988, 0.6931472
        %v1990 = vlog2.pop %v1968
        %v1991 = vmul.f32 %v1990, 0.6931472
        %v1992 = vlog2.pop %v1969
        %v1993 = vmul.f32 %v1992, 0.6931472
        %v1994 = vlog2.pop %v1970
        %v1995 = vmul.f32 %v1994, 0.6931472
        %v1996 = vlog2.pop %v1971
        %v1997 = vmul.f32 %v1996, 0.6931472
        %v1998 = vlog2.pop %v1972
        %v1999 = vmul.f32 %v1998, 0.6931472
        %v2000 = vlog2.pop %v1973
        %v2001 = vmul.f32 %v2000, 0.6931472
        %v2002 = vlog2.pop %v1974
        %v2003 = vmul.f32 %v2002, 0.6931472
        %v2004 = vlog2.pop %v1975
        %v2005 = vmul.f32 %v2004, 0.6931472
        %v2006 = vlog2.pop %v1976
        %v2007 = vmul.f32 %v2006, 0.6931472
        %v2008 = vlog2.pop %v1977
        %v2009 = vmul.f32 %v2008, 0.6931472
        %vm2010 = vcmp.gt.f32.partialorder %v1803, 20.0
        %vm2011 = vcmp.gt.f32.partialorder %v1805, 20.0
        %vm2012 = vcmp.gt.f32.partialorder %v1892, 20.0
        %vm2013 = vcmp.gt.f32.partialorder %v1894, 20.0
        %vm2014 = vcmp.gt.f32.partialorder %v1809, 20.0
        %vm2015 = vcmp.gt.f32.partialorder %v1811, 20.0
        %vm2016 = vcmp.gt.f32.partialorder %v1898, 20.0
        %vm2017 = vcmp.gt.f32.partialorder %v1900, 20.0
        %vm2018 = vcmp.gt.f32.partialorder %v1815, 20.0
        %vm2019 = vcmp.gt.f32.partialorder %v1817, 20.0
        %vm2020 = vcmp.gt.f32.partialorder %v1904, 20.0
        %vm2021 = vcmp.gt.f32.partialorder %v1906, 20.0
        %vm2022 = vcmp.gt.f32.partialorder %v1821, 20.0
        %vm2023 = vcmp.gt.f32.partialorder %v1823, 20.0
        %vm2024 = vcmp.gt.f32.partialorder %v1910, 20.0
        %vm2025 = vcmp.gt.f32.partialorder %v1912, 20.0
        %v2026 = vsel %vm2010, %v1803, %v1979
        %v2027 = vsel %vm2011, %v1805, %v1981
        %v2028 = vsel %vm2012, %v1892, %v1983
        %v2029 = vsel %vm2013, %v1894, %v1985
        %v2030 = vsel %vm2014, %v1809, %v1987
        %v2031 = vsel %vm2015, %v1811, %v1989
        %v2032 = vsel %vm2016, %v1898, %v1991
        %v2033 = vsel %vm2017, %v1900, %v1993
        %v2034 = vsel %vm2018, %v1815, %v1995
        %v2035 = vsel %vm2019, %v1817, %v1997
        %v2036 = vsel %vm2020, %v1904, %v1999
        %v2037 = vsel %vm2021, %v1906, %v2001
        %v2038 = vsel %vm2022, %v1821, %v2003
        %v2039 = vsel %vm2023, %v1823, %v2005
        %v2040 = vsel %vm2024, %v1910, %v2007
        %v2041 = vsel %vm2025, %v1912, %v2009
        %s2042 = scalar_lea.vmem [#allocation2], 128
        %v2043 = vld [vmem:[%s2042] sm:$0xff]
        %v2044 = vld [vmem:[%s2042 + $0x8] sm:$0xff]
        %v2045 = vld [vmem:[%s2042 + $0x10] sm:$0xff]
        %v2046 = vld [vmem:[%s2042 + $0x18] sm:$0xff]
        %s2047 = scalar_lea.vmem [#allocation4], 128
        %v2048 = vld [vmem:[%s2047] sm:$0xff]
        %v2049 = vld [vmem:[%s2047 + $0x8] sm:$0xff]
        %v2050 = vld [vmem:[%s2047 + $0x10] sm:$0xff]
        %v2051 = vld [vmem:[%s2047 + $0x18] sm:$0xff]
        %2053 = vset.pattern.permute.xlu0 0
        %2054 = vperm.xlu0 %2053, %v2048
        %v2055 = vpop.permute.xlu0 %2054
        %2058 = vset.pattern.permute.xlu0 0
        %2059 = vperm.xlu0 %2058, %v2049
        %v2060 = vpop.permute.xlu0 %2059
        %2063 = vset.pattern.permute.xlu0 0
        %2064 = vperm.xlu0 %2063, %v2050
        %v2065 = vpop.permute.xlu0 %2064
        %2068 = vset.pattern.permute.xlu0 0
        %2069 = vperm.xlu0 %2068, %v2051
        %v2070 = vpop.permute.xlu0 %2069
        %v2073 = vsel %vm679, %v2043, 0
        %v2076 = vsel %vm679, %v2044, 0
        %v2079 = vsel %vm679, %v2045, 0
        %v2082 = vsel %vm679, %v2046, 0
        %2084 = vmatprep.subr.mxu0 0.0
        %2085 = vmatpush1.msra.mxu0 0.0
        %2086 = vmatprep.subr.mxu0 0.0
        %2087 = vmatpush1.msra.mxu0 0.0
        %2088 = vmatprep.subr.mxu0 0.0
        %2089 = vmatpush1.msra.mxu0 0.0
        %2090 = vmatprep.subr.mxu0 0.0
        %2091 = vmatpush1.msra.mxu0 0.0
        %2092 = vmatprep.subr.mxu0 0.0
        %2093 = vmatpush1.msra.mxu0 0.0
        %2094 = vmatprep.subr.mxu0 0.0
        %2095 = vmatpush1.msra.mxu0 0.0
        %2096 = vmatprep.subr.mxu0 0.0
        %2097 = vmatpush1.msra.mxu0 0.0
        %2098 = vmatprep.subr.mxu0 0.0
        %2099 = vmatpush1.msra.mxu0 0.0
        %2100 = vmatprep.subr.mxu0 0.0
        %2101 = vmatpush1.msra.mxu0 0.0
        %2102 = vmatprep.subr.mxu0 0.0
        %2103 = vmatpush1.msra.mxu0 0.0
        %2104 = vmatprep.subr.mxu0 0.0
        %2105 = vmatpush1.msra.mxu0 0.0
        %2106 = vmatprep.subr.mxu0 0.0
        %2107 = vmatpush1.msra.mxu0 0.0
        %2108 = vmatprep.subr.mxu0 %v2039
        %2109 = vmatpush1.msra.mxu0 %v2038
        %2110 = vmatprep.subr.mxu0 %v2035
        %2111 = vmatpush1.msra.mxu0 %v2034
        %2112 = vmatprep.subr.mxu0 %v2031
        %2113 = vmatpush1.msra.mxu0 %v2030
        %2114 = vmatprep.subr.mxu0 %v2027
        %2115 = vmatpush1.msra.mxu0 %v2026
        %2116 = vmatprep.subr.mxu0 0.0
        %2117 = vmatpush2.msra.mxu0 0.0
        %2118 = vmatprep.subr.mxu0 0.0
        %2119 = vmatpush2.msra.mxu0 0.0
        %2120 = vmatprep.subr.mxu0 0.0
        %2121 = vmatpush2.msra.mxu0 0.0
        %2122 = vmatprep.subr.mxu0 0.0
        %2123 = vmatpush2.msra.mxu0 0.0
        %2124 = vmatprep.subr.mxu0 0.0
        %2125 = vmatpush2.msra.mxu0 0.0
        %2126 = vmatprep.subr.mxu0 0.0
        %2127 = vmatpush2.msra.mxu0 0.0
        %2128 = vmatprep.subr.mxu0 0.0
        %2129 = vmatpush2.msra.mxu0 0.0
        %2130 = vmatprep.subr.mxu0 0.0
        %2131 = vmatpush2.msra.mxu0 0.0
        %2132 = vmatprep.subr.mxu0 0.0
        %2133 = vmatpush2.msra.mxu0 0.0
        %2134 = vmatprep.subr.mxu0 0.0
        %2135 = vmatpush2.msra.mxu0 0.0
        %2136 = vmatprep.subr.mxu0 0.0
        %2137 = vmatpush2.msra.mxu0 0.0
        %2138 = vmatprep.subr.mxu0 0.0
        %2139 = vmatpush2.msra.mxu0 0.0
        %2140 = vmatprep.subr.mxu0 0.0
        %2141 = vmatpush2.msra.mxu0 0.0
        %2142 = vmatprep.subr.mxu0 0.0
        %2143 = vmatpush2.msra.mxu0 0.0
        %2144 = vmatprep.subr.mxu0 0.0
        %2145 = vmatpush2.msra.mxu0 0.0
        %2146 = vmatprep.subr.mxu0 0.0
        %2147 = vmatpush2.msra.mxu0 0.0
        %2148 = vmatprep.mubr.f32.mxu0 0.0
        %2149 = vmatmul.mubr.f32.gmra.mxu0 %v2073
        %v2150 = vpop.f32.mrf.mxu0
        %v2151 = vadd.f32 %v2055, %v2150
        %v2152 = vpop.f32.mrf.mxu0
        %v2153 = vadd.f32 %v2055, %v2152
        %2154 = vmatprep.mubr.f32.mxu0 0.0
        %2155 = vmatmul.mubr.f32.gmra.mxu0 %v2076
        %v2156 = vpop.f32.mrf.mxu0
        %v2157 = vadd.f32 %v2060, %v2156
        %v2158 = vpop.f32.mrf.mxu0
        %v2159 = vadd.f32 %v2060, %v2158
        %2160 = vmatprep.mubr.f32.mxu0 0.0
        %2161 = vmatmul.mubr.f32.gmra.mxu0 %v2079
        %v2162 = vpop.f32.mrf.mxu0
        %v2163 = vadd.f32 %v2065, %v2162
        %v2164 = vpop.f32.mrf.mxu0
        %v2165 = vadd.f32 %v2065, %v2164
        %2166 = vmatprep.mubr.f32.mxu0 0.0
        %2167 = vmatmul.mubr.f32.gmra.mxu0 %v2082
        %v2168 = vpop.f32.mrf.mxu0
        %v2169 = vadd.f32 %v2070, %v2168
        %v2170 = vpop.f32.mrf.mxu0
        %v2171 = vadd.f32 %v2070, %v2170
        %2172 = vdwg.mxu0
        %2173 = vmatprep.subr.mxu0 0.0
        %2174 = vmatpush1.msra.mxu0 0.0
        %2175 = vmatprep.subr.mxu0 0.0
        %2176 = vmatpush1.msra.mxu0 0.0
        %2177 = vmatprep.subr.mxu0 0.0
        %2178 = vmatpush1.msra.mxu0 0.0
        %2179 = vmatprep.subr.mxu0 0.0
        %2180 = vmatpush1.msra.mxu0 0.0
        %2181 = vmatprep.subr.mxu0 0.0
        %2182 = vmatpush1.msra.mxu0 0.0
        %2183 = vmatprep.subr.mxu0 0.0
        %2184 = vmatpush1.msra.mxu0 0.0
        %2185 = vmatprep.subr.mxu0 0.0
        %2186 = vmatpush1.msra.mxu0 0.0
        %2187 = vmatprep.subr.mxu0 0.0
        %2188 = vmatpush1.msra.mxu0 0.0
        %2189 = vmatprep.subr.mxu0 0.0
        %2190 = vmatpush1.msra.mxu0 0.0
        %2191 = vmatprep.subr.mxu0 0.0
        %2192 = vmatpush1.msra.mxu0 0.0
        %2193 = vmatprep.subr.mxu0 0.0
        %2194 = vmatpush1.msra.mxu0 0.0
        %2195 = vmatprep.subr.mxu0 0.0
        %2196 = vmatpush1.msra.mxu0 0.0
        %2197 = vmatprep.subr.mxu0 %v2041
        %2198 = vmatpush1.msra.mxu0 %v2040
        %2199 = vmatprep.subr.mxu0 %v2037
        %2200 = vmatpush1.msra.mxu0 %v2036
        %2201 = vmatprep.subr.mxu0 %v2033
        %2202 = vmatpush1.msra.mxu0 %v2032
        %2203 = vmatprep.subr.mxu0 %v2029
        %2204 = vmatpush1.msra.mxu0 %v2028
        %2205 = vmatprep.subr.mxu0 0.0
        %2206 = vmatpush2.msra.mxu0 0.0
        %2207 = vmatprep.subr.mxu0 0.0
        %2208 = vmatpush2.msra.mxu0 0.0
        %2209 = vmatprep.subr.mxu0 0.0
        %2210 = vmatpush2.msra.mxu0 0.0
        %2211 = vmatprep.subr.mxu0 0.0
        %2212 = vmatpush2.msra.mxu0 0.0
        %2213 = vmatprep.subr.mxu0 0.0
        %2214 = vmatpush2.msra.mxu0 0.0
        %2215 = vmatprep.subr.mxu0 0.0
        %2216 = vmatpush2.msra.mxu0 0.0
        %2217 = vmatprep.subr.mxu0 0.0
        %2218 = vmatpush2.msra.mxu0 0.0
        %2219 = vmatprep.subr.mxu0 0.0
        %2220 = vmatpush2.msra.mxu0 0.0
        %2221 = vmatprep.subr.mxu0 0.0
        %2222 = vmatpush2.msra.mxu0 0.0
        %2223 = vmatprep.subr.mxu0 0.0
        %2224 = vmatpush2.msra.mxu0 0.0
        %2225 = vmatprep.subr.mxu0 0.0
        %2226 = vmatpush2.msra.mxu0 0.0
        %2227 = vmatprep.subr.mxu0 0.0
        %2228 = vmatpush2.msra.mxu0 0.0
        %2229 = vmatprep.subr.mxu0 0.0
        %2230 = vmatpush2.msra.mxu0 0.0
        %2231 = vmatprep.subr.mxu0 0.0
        %2232 = vmatpush2.msra.mxu0 0.0
        %2233 = vmatprep.subr.mxu0 0.0
        %2234 = vmatpush2.msra.mxu0 0.0
        %2235 = vmatprep.subr.mxu0 0.0
        %2236 = vmatpush2.msra.mxu0 0.0
        %2237 = vmatprep.mubr.f32.mxu0 0.0
        %2238 = vmatmul.mubr.f32.gmra.mxu0 %v2073
        %v2239 = vpop.f32.mrf.mxu0
        %v2240 = vadd.f32 %v2055, %v2239
        %v2241 = vpop.f32.mrf.mxu0
        %v2242 = vadd.f32 %v2055, %v2241
        %2243 = vmatprep.mubr.f32.mxu0 0.0
        %2244 = vmatmul.mubr.f32.gmra.mxu0 %v2076
        %v2245 = vpop.f32.mrf.mxu0
        %v2246 = vadd.f32 %v2060, %v2245
        %v2247 = vpop.f32.mrf.mxu0
        %v2248 = vadd.f32 %v2060, %v2247
        %2249 = vmatprep.mubr.f32.mxu0 0.0
        %2250 = vmatmul.mubr.f32.gmra.mxu0 %v2079
        %v2251 = vpop.f32.mrf.mxu0
        %v2252 = vadd.f32 %v2065, %v2251
        %v2253 = vpop.f32.mrf.mxu0
        %v2254 = vadd.f32 %v2065, %v2253
        %2255 = vmatprep.mubr.f32.mxu0 0.0
        %2256 = vmatmul.mubr.f32.gmra.mxu0 %v2082
        %v2257 = vpop.f32.mrf.mxu0
        %v2258 = vadd.f32 %v2070, %v2257
        %v2259 = vpop.f32.mrf.mxu0
        %v2260 = vadd.f32 %v2070, %v2259
        %2261 = vdwg.mxu0
        %v2262 = vmin.f32 %v2151, 20.0
        %v2263 = vmin.f32 %v2153, 20.0
        %v2264 = vmin.f32 %v2240, 20.0
        %v2265 = vmin.f32 %v2242, 20.0
        %v2266 = vmin.f32 %v2157, 20.0
        %v2267 = vmin.f32 %v2159, 20.0
        %v2268 = vmin.f32 %v2246, 20.0
        %v2269 = vmin.f32 %v2248, 20.0
        %v2270 = vmin.f32 %v2163, 20.0
        %v2271 = vmin.f32 %v2165, 20.0
        %v2272 = vmin.f32 %v2252, 20.0
        %v2273 = vmin.f32 %v2254, 20.0
        %v2274 = vmin.f32 %v2169, 20.0
        %v2275 = vmin.f32 %v2171, 20.0
        %v2276 = vmin.f32 %v2258, 20.0
        %v2277 = vmin.f32 %v2260, 20.0
        %v2278 = vmul.f32 %v2262, 1.442695
        %v2279 = vpow.pop %v2278
        %v2280 = vmul.f32 %v2263, 1.442695
        %v2281 = vpow.pop %v2280
        %v2282 = vmul.f32 %v2264, 1.442695
        %v2283 = vpow.pop %v2282
        %v2284 = vmul.f32 %v2265, 1.442695
        %v2285 = vpow.pop %v2284
        %v2286 = vmul.f32 %v2266, 1.442695
        %v2287 = vpow.pop %v2286
        %v2288 = vmul.f32 %v2267, 1.442695
        %v2289 = vpow.pop %v2288
        %v2290 = vmul.f32 %v2268, 1.442695
        %v2291 = vpow.pop %v2290
        %v2292 = vmul.f32 %v2269, 1.442695
        %v2293 = vpow.pop %v2292
        %v2294 = vmul.f32 %v2270, 1.442695
        %v2295 = vpow.pop %v2294
        %v2296 = vmul.f32 %v2271, 1.442695
        %v2297 = vpow.pop %v2296
        %v2298 = vmul.f32 %v2272, 1.442695
        %v2299 = vpow.pop %v2298
        %v2300 = vmul.f32 %v2273, 1.442695
        %v2301 = vpow.pop %v2300
        %v2302 = vmul.f32 %v2274, 1.442695
        %v2303 = vpow.pop %v2302
        %v2304 = vmul.f32 %v2275, 1.442695
        %v2305 = vpow.pop %v2304
        %v2306 = vmul.f32 %v2276, 1.442695
        %v2307 = vpow.pop %v2306
        %v2308 = vmul.f32 %v2277, 1.442695
        %v2309 = vpow.pop %v2308
        %v2310 = vadd.f32 %v2279, 1.0
        %v2311 = vadd.f32 %v2281, 1.0
        %v2312 = vadd.f32 %v2283, 1.0
        %v2313 = vadd.f32 %v2285, 1.0
        %v2314 = vadd.f32 %v2287, 1.0
        %v2315 = vadd.f32 %v2289, 1.0
        %v2316 = vadd.f32 %v2291, 1.0
        %v2317 = vadd.f32 %v2293, 1.0
        %v2318 = vadd.f32 %v2295, 1.0
        %v2319 = vadd.f32 %v2297, 1.0
        %v2320 = vadd.f32 %v2299, 1.0
        %v2321 = vadd.f32 %v2301, 1.0
        %v2322 = vadd.f32 %v2303, 1.0
        %v2323 = vadd.f32 %v2305, 1.0
        %v2324 = vadd.f32 %v2307, 1.0
        %v2325 = vadd.f32 %v2309, 1.0
        %v2326 = vlog2.pop %v2310
        %v2327 = vmul.f32 %v2326, 0.6931472
        %v2328 = vlog2.pop %v2311
        %v2329 = vmul.f32 %v2328, 0.6931472
        %v2330 = vlog2.pop %v2312
        %v2331 = vmul.f32 %v2330, 0.6931472
        %v2332 = vlog2.pop %v2313
        %v2333 = vmul.f32 %v2332, 0.6931472
        %v2334 = vlog2.pop %v2314
        %v2335 = vmul.f32 %v2334, 0.6931472
        %v2336 = vlog2.pop %v2315
        %v2337 = vmul.f32 %v2336, 0.6931472
        %v2338 = vlog2.pop %v2316
        %v2339 = vmul.f32 %v2338, 0.6931472
        %v2340 = vlog2.pop %v2317
        %v2341 = vmul.f32 %v2340, 0.6931472
        %v2342 = vlog2.pop %v2318
        %v2343 = vmul.f32 %v2342, 0.6931472
        %v2344 = vlog2.pop %v2319
        %v2345 = vmul.f32 %v2344, 0.6931472
        %v2346 = vlog2.pop %v2320
        %v2347 = vmul.f32 %v2346, 0.6931472
        %v2348 = vlog2.pop %v2321
        %v2349 = vmul.f32 %v2348, 0.6931472
        %v2350 = vlog2.pop %v2322
        %v2351 = vmul.f32 %v2350, 0.6931472
        %v2352 = vlog2.pop %v2323
        %v2353 = vmul.f32 %v2352, 0.6931472
        %v2354 = vlog2.pop %v2324
        %v2355 = vmul.f32 %v2354, 0.6931472
        %v2356 = vlog2.pop %v2325
        %v2357 = vmul.f32 %v2356, 0.6931472
        %vm2358 = vcmp.gt.f32.partialorder %v2151, 20.0
        %vm2359 = vcmp.gt.f32.partialorder %v2153, 20.0
        %vm2360 = vcmp.gt.f32.partialorder %v2240, 20.0
        %vm2361 = vcmp.gt.f32.partialorder %v2242, 20.0
        %vm2362 = vcmp.gt.f32.partialorder %v2157, 20.0
        %vm2363 = vcmp.gt.f32.partialorder %v2159, 20.0
        %vm2364 = vcmp.gt.f32.partialorder %v2246, 20.0
        %vm2365 = vcmp.gt.f32.partialorder %v2248, 20.0
        %vm2366 = vcmp.gt.f32.partialorder %v2163, 20.0
        %vm2367 = vcmp.gt.f32.partialorder %v2165, 20.0
        %vm2368 = vcmp.gt.f32.partialorder %v2252, 20.0
        %vm2369 = vcmp.gt.f32.partialorder %v2254, 20.0
        %vm2370 = vcmp.gt.f32.partialorder %v2169, 20.0
        %vm2371 = vcmp.gt.f32.partialorder %v2171, 20.0
        %vm2372 = vcmp.gt.f32.partialorder %v2258, 20.0
        %vm2373 = vcmp.gt.f32.partialorder %v2260, 20.0
        %v2374 = vsel %vm2358, %v2151, %v2327
        %v2375 = vsel %vm2359, %v2153, %v2329
        %v2376 = vsel %vm2360, %v2240, %v2331
        %v2377 = vsel %vm2361, %v2242, %v2333
        %v2378 = vsel %vm2362, %v2157, %v2335
        %v2379 = vsel %vm2363, %v2159, %v2337
        %v2380 = vsel %vm2364, %v2246, %v2339
        %v2381 = vsel %vm2365, %v2248, %v2341
        %v2382 = vsel %vm2366, %v2163, %v2343
        %v2383 = vsel %vm2367, %v2165, %v2345
        %v2384 = vsel %vm2368, %v2252, %v2347
        %v2385 = vsel %vm2369, %v2254, %v2349
        %v2386 = vsel %vm2370, %v2169, %v2351
        %v2387 = vsel %vm2371, %v2171, %v2353
        %v2388 = vsel %vm2372, %v2258, %v2355
        %v2389 = vsel %vm2373, %v2260, %v2357
        %s2390 = scalar_lea.vmem [#allocation2], 160
        %v2391 = vld [vmem:[%s2390] sm:$0xff]
        %v2392 = vld [vmem:[%s2390 + $0x8] sm:$0xff]
        %v2393 = vld [vmem:[%s2390 + $0x10] sm:$0xff]
        %v2394 = vld [vmem:[%s2390 + $0x18] sm:$0xff]
        %s2395 = scalar_lea.vmem [#allocation4], 160
        %v2396 = vld [vmem:[%s2395] sm:$0xff]
        %v2397 = vld [vmem:[%s2395 + $0x8] sm:$0xff]
        %v2398 = vld [vmem:[%s2395 + $0x10] sm:$0xff]
        %v2399 = vld [vmem:[%s2395 + $0x18] sm:$0xff]
        %2401 = vset.pattern.permute.xlu0 0
        %2402 = vperm.xlu0 %2401, %v2396
        %v2403 = vpop.permute.xlu0 %2402
        %2406 = vset.pattern.permute.xlu0 0
        %2407 = vperm.xlu0 %2406, %v2397
        %v2408 = vpop.permute.xlu0 %2407
        %2410 = vset.pattern.permute.xlu0 0
        %2411 = vperm.xlu0 %2410, %v2398
        %v2412 = vpop.permute.xlu0 %2411
        %2414 = vset.pattern.permute.xlu0 0
        %2415 = vperm.xlu0 %2414, %v2399
        %v2416 = vpop.permute.xlu0 %2415
        %v2418 = vsel %vm679, %v2391, 0
        %v2421 = vsel %vm679, %v2392, 0
        %v2424 = vsel %vm679, %v2393, 0
        %v2427 = vsel %vm679, %v2394, 0
        %2429 = vmatprep.subr.mxu0 0.0
        %2430 = vmatpush1.msra.mxu0 0.0
        %2431 = vmatprep.subr.mxu0 0.0
        %2432 = vmatpush1.msra.mxu0 0.0
        %2433 = vmatprep.subr.mxu0 0.0
        %2434 = vmatpush1.msra.mxu0 0.0
        %2435 = vmatprep.subr.mxu0 0.0
        %2436 = vmatpush1.msra.mxu0 0.0
        %2437 = vmatprep.subr.mxu0 0.0
        %2438 = vmatpush1.msra.mxu0 0.0
        %2439 = vmatprep.subr.mxu0 0.0
        %2440 = vmatpush1.msra.mxu0 0.0
        %2441 = vmatprep.subr.mxu0 0.0
        %2442 = vmatpush1.msra.mxu0 0.0
        %2443 = vmatprep.subr.mxu0 0.0
        %2444 = vmatpush1.msra.mxu0 0.0
        %2445 = vmatprep.subr.mxu0 0.0
        %2446 = vmatpush1.msra.mxu0 0.0
        %2447 = vmatprep.subr.mxu0 0.0
        %2448 = vmatpush1.msra.mxu0 0.0
        %2449 = vmatprep.subr.mxu0 0.0
        %2450 = vmatpush1.msra.mxu0 0.0
        %2451 = vmatprep.subr.mxu0 0.0
        %2452 = vmatpush1.msra.mxu0 0.0
        %2453 = vmatprep.subr.mxu0 %v2387
        %2454 = vmatpush1.msra.mxu0 %v2386
        %2455 = vmatprep.subr.mxu0 %v2383
        %2456 = vmatpush1.msra.mxu0 %v2382
        %2457 = vmatprep.subr.mxu0 %v2379
        %2458 = vmatpush1.msra.mxu0 %v2378
        %2459 = vmatprep.subr.mxu0 %v2375
        %2460 = vmatpush1.msra.mxu0 %v2374
        %2461 = vmatprep.subr.mxu0 0.0
        %2462 = vmatpush2.msra.mxu0 0.0
        %2463 = vmatprep.subr.mxu0 0.0
        %2464 = vmatpush2.msra.mxu0 0.0
        %2465 = vmatprep.subr.mxu0 0.0
        %2466 = vmatpush2.msra.mxu0 0.0
        %2467 = vmatprep.subr.mxu0 0.0
        %2468 = vmatpush2.msra.mxu0 0.0
        %2469 = vmatprep.subr.mxu0 0.0
        %2470 = vmatpush2.msra.mxu0 0.0
        %2471 = vmatprep.subr.mxu0 0.0
        %2472 = vmatpush2.msra.mxu0 0.0
        %2473 = vmatprep.subr.mxu0 0.0
        %2474 = vmatpush2.msra.mxu0 0.0
        %2475 = vmatprep.subr.mxu0 0.0
        %2476 = vmatpush2.msra.mxu0 0.0
        %2477 = vmatprep.subr.mxu0 0.0
        %2478 = vmatpush2.msra.mxu0 0.0
        %2479 = vmatprep.subr.mxu0 0.0
        %2480 = vmatpush2.msra.mxu0 0.0
        %2481 = vmatprep.subr.mxu0 0.0
        %2482 = vmatpush2.msra.mxu0 0.0
        %2483 = vmatprep.subr.mxu0 0.0
        %2484 = vmatpush2.msra.mxu0 0.0
        %2485 = vmatprep.subr.mxu0 0.0
        %2486 = vmatpush2.msra.mxu0 0.0
        %2487 = vmatprep.subr.mxu0 0.0
        %2488 = vmatpush2.msra.mxu0 0.0
        %2489 = vmatprep.subr.mxu0 0.0
        %2490 = vmatpush2.msra.mxu0 0.0
        %2491 = vmatprep.subr.mxu0 0.0
        %2492 = vmatpush2.msra.mxu0 0.0
        %2493 = vmatprep.mubr.f32.mxu0 0.0
        %2494 = vmatmul.mubr.f32.gmra.mxu0 %v2418
        %v2495 = vpop.f32.mrf.mxu0
        %v2496 = vadd.f32 %v2403, %v2495
        %v2497 = vpop.f32.mrf.mxu0
        %v2498 = vadd.f32 %v2403, %v2497
        %2499 = vmatprep.mubr.f32.mxu0 0.0
        %2500 = vmatmul.mubr.f32.gmra.mxu0 %v2421
        %v2501 = vpop.f32.mrf.mxu0
        %v2502 = vpop.f32.mrf.mxu0
        %2503 = vmatprep.mubr.f32.mxu0 0.0
        %2504 = vmatmul.mubr.f32.gmra.mxu0 %v2424
        %v2505 = vpop.f32.mrf.mxu0
        %v2506 = vpop.f32.mrf.mxu0
        %2507 = vmatprep.mubr.f32.mxu0 0.0
        %2508 = vmatmul.mubr.f32.gmra.mxu0 %v2427
        %v2509 = vpop.f32.mrf.mxu0
        %v2510 = vpop.f32.mrf.mxu0
        %2511 = vdwg.mxu0
        %2512 = vmatprep.subr.mxu0 0.0
        %2513 = vmatpush1.msra.mxu0 0.0
        %2514 = vmatprep.subr.mxu0 0.0
        %2515 = vmatpush1.msra.mxu0 0.0
        %2516 = vmatprep.subr.mxu0 0.0
        %2517 = vmatpush1.msra.mxu0 0.0
        %2518 = vmatprep.subr.mxu0 0.0
        %2519 = vmatpush1.msra.mxu0 0.0
        %2520 = vmatprep.subr.mxu0 0.0
        %2521 = vmatpush1.msra.mxu0 0.0
        %2522 = vmatprep.subr.mxu0 0.0
        %2523 = vmatpush1.msra.mxu0 0.0
        %2524 = vmatprep.subr.mxu0 0.0
        %2525 = vmatpush1.msra.mxu0 0.0
        %2526 = vmatprep.subr.mxu0 0.0
        %2527 = vmatpush1.msra.mxu0 0.0
        %2528 = vmatprep.subr.mxu0 0.0
        %2529 = vmatpush1.msra.mxu0 0.0
        %2530 = vmatprep.subr.mxu0 0.0
        %2531 = vmatpush1.msra.mxu0 0.0
        %2532 = vmatprep.subr.mxu0 0.0
        %2533 = vmatpush1.msra.mxu0 0.0
        %2534 = vmatprep.subr.mxu0 0.0
        %2535 = vmatpush1.msra.mxu0 0.0
        %2536 = vmatprep.subr.mxu0 %v2389
        %2537 = vmatpush1.msra.mxu0 %v2388
        %2538 = vmatprep.subr.mxu0 %v2385
        %2539 = vmatpush1.msra.mxu0 %v2384
        %2540 = vmatprep.subr.mxu0 %v2381
        %2541 = vmatpush1.msra.mxu0 %v2380
        %2542 = vmatprep.subr.mxu0 %v2377
        %2543 = vmatpush1.msra.mxu0 %v2376
        %2544 = vmatprep.subr.mxu0 0.0
        %2545 = vmatpush2.msra.mxu0 0.0
        %2546 = vmatprep.subr.mxu0 0.0
        %2547 = vmatpush2.msra.mxu0 0.0
        %2548 = vmatprep.subr.mxu0 0.0
        %2549 = vmatpush2.msra.mxu0 0.0
        %2550 = vmatprep.subr.mxu0 0.0
        %2551 = vmatpush2.msra.mxu0 0.0
        %2552 = vmatprep.subr.mxu0 0.0
        %2553 = vmatpush2.msra.mxu0 0.0
        %2554 = vmatprep.subr.mxu0 0.0
        %2555 = vmatpush2.msra.mxu0 0.0
        %2556 = vmatprep.subr.mxu0 0.0
        %2557 = vmatpush2.msra.mxu0 0.0
        %2558 = vmatprep.subr.mxu0 0.0
        %2559 = vmatpush2.msra.mxu0 0.0
        %2560 = vmatprep.subr.mxu0 0.0
        %2561 = vmatpush2.msra.mxu0 0.0
        %2562 = vmatprep.subr.mxu0 0.0
        %2563 = vmatpush2.msra.mxu0 0.0
        %2564 = vmatprep.subr.mxu0 0.0
        %2565 = vmatpush2.msra.mxu0 0.0
        %2566 = vmatprep.subr.mxu0 0.0
        %2567 = vmatpush2.msra.mxu0 0.0
        %2568 = vmatprep.subr.mxu0 0.0
        %2569 = vmatpush2.msra.mxu0 0.0
        %2570 = vmatprep.subr.mxu0 0.0
        %2571 = vmatpush2.msra.mxu0 0.0
        %2572 = vmatprep.subr.mxu0 0.0
        %2573 = vmatpush2.msra.mxu0 0.0
        %2574 = vmatprep.subr.mxu0 0.0
        %2575 = vmatpush2.msra.mxu0 0.0
        %2576 = vmatprep.mubr.f32.mxu0 0.0
        %2577 = vmatmul.mubr.f32.gmra.mxu0 %v2418
        %v2578 = vpop.f32.mrf.mxu0
        %v2579 = vadd.f32 %v2403, %v2578
        %v2580 = vpop.f32.mrf.mxu0
        %v2581 = vadd.f32 %v2403, %v2580
        %2582 = vmatprep.mubr.f32.mxu0 0.0
        %2583 = vmatmul.mubr.f32.gmra.mxu0 %v2421
        %v2584 = vpop.f32.mrf.mxu0
        %v2585 = vpop.f32.mrf.mxu0
        %2586 = vmatprep.mubr.f32.mxu0 0.0
        %2587 = vmatmul.mubr.f32.gmra.mxu0 %v2424
        %v2588 = vpop.f32.mrf.mxu0
        %v2589 = vpop.f32.mrf.mxu0
        %2590 = vmatprep.mubr.f32.mxu0 0.0
        %2591 = vmatmul.mubr.f32.gmra.mxu0 %v2427
        %v2592 = vpop.f32.mrf.mxu0
        %v2593 = vpop.f32.mrf.mxu0
        %2594 = vdwg.mxu0
        %v2599 = vcombine.low %v2496, %v2498
        %v2600 = vcombine.low %v2579, %v2581
        %v2602 = vunpack.c.l.s4 1966171168
        %v2603 = vunpack.c.0.s8 %v2602
        %v2604 = vlaneseq
        %v2605 = vshrl.u32 %v2604, 7
        %v2606 = vsub.s32 %v2603, %v2605
        %v2607 = vrot.slane %v2599, %v2606
        %v2609 = vunpack.c.l.s4 1966171168
        %v2610 = vunpack.c.0.s8 %v2609
        %v2611 = vlaneseq
        %v2612 = vshrl.u32 %v2611, 7
        %v2613 = vsub.s32 %v2610, %v2612
        %v2614 = vrot.slane %v2600, %v2613
        %v2615 = vcombine.low %v2607, %v2614
        %v2617 = vunpack.c.l.s4 1966171168
        %v2618 = vunpack.c.0.s8 %v2617
        %v2619 = vlaneseq
        %v2620 = vshrl.u32 %v2619, 7
        %v2621 = vsub.s32 %v2618, %v2620
        %v2622 = vrot.slane %v2615, %v2621
        %v2624 = vlaneseq
        %vm2625 = vcmp.ge.s32.totalorder %v2624, 0
        %vm2626 = vcmp.lt.s32.totalorder %v2624, 512
        %vm2627 = vmand %vm2625, %vm2626
        %2628 = vst.msk [vmem:[%s200] sm:$0xf] %vm2627, %v2622
        %s2629 = smul.u32 4, %s16
        %p2630 = scmp.lt.s32.totalorder %s2629, 7
        %s2631 = scalar_select %p2630, %s2629, 7
        %s2632 = scalar_lea.vmem %s3, %s2631
        // Predicated region
        $region41: #{_run.1} parent=31 // pred_check
          %p2633 = pneg %p102
        $region42: #{_run.1} parent=31 // pred_check_branch
          %2635 = sbr.rel (%p2633) target = $region44
        $region43: #{_run.1} parent=31 // pred_region
          %s2636 = smul.u32 4, %s16
        $region44: #{_run.1} parent=31 // pred_fallthru
          _
      $region32: #{_run.1} parent=5 // pred_fallthru
        _
      %p2637 = scmp.le.s32.totalorder 2, %s11
      // Predicated region
      $region45: #{_run.1} parent=5 // pred_check
        %p2638 = pneg %p2637
      $region46: #{_run.1} parent=5 // pred_check_branch
        %2640 = sbr.rel (%p2638) target = $region48
      $region47: #{_run.1} parent=5 // pred_region
        %s2641 = ssub.s32 %s11, 2
        // Predicated region
        $region49: #{_run.1} parent=47 // pred_check
          %p2642 = pneg %p108
        $region50: #{_run.1} parent=47 // pred_check_branch
          %2644 = sbr.rel (%p2642) target = $region52
        $region51: #{_run.1} parent=47 // pred_region
          %s2645 = smul.u32 4, %s17
          %p2646 = scmp.lt.s32.totalorder %s2645, 7
          %s2647 = scalar_select %p2646, %s2645, 7
          %s2648 = scalar_lea.vmem %s3, %s2647
        $region52: #{_run.1} parent=47 // pred_fallthru
          _
      $region48: #{_run.1} parent=5 // pred_fallthru
        _
    $region6: #{_run.1} parent=1 // loop_footer
      %s15 = sadd.s32 1, %s11
    $region7: #{_run.1} parent=1 // loop_footer_branch
      %10 = sbr.rel target = $region3
    $region8: #{_run.1} parent=1 // loop_exit
      _
    %2649 = vsyncpa [#allocation3], 1
    %s2650 = scalar_lea.sflag [#allocation3], 1
    %2651 = vsyncpa %s2650, 1
    %2652 = vsyncpa [#allocation5], 1

</llo_original>
